<compile_context>
chip_gen: v5e
topology: v5e:2x2
jax: 0.10.0
libtpu: 0.0.40
codegen_flags: <defaults>
</compile_context>

<pallas_src>
import functools

import jax
import jax.numpy as jnp
from jax.experimental import pallas as pl
from jax.experimental.pallas import tpu as pltpu


# ----------------------------------------------------------------------------- utils
def autopad(k, p=None):
    if p is None:
        p = k // 2 if isinstance(k, int) else [x // 2 for x in k]
    return p


def _round_up(x, m):
    return (x + m - 1) // m * m


# ----------------------------------------------------------------------------- Pallas kernels
def _matmul_bias_silu_kernel(*refs, has_res):
    """Fused (patches_bf16 @ weight_bf16) -> f32 acc -> +bias -> SiLU -> (+ residual)."""
    if has_res:
        a_ref, b_ref, bias_ref, res_ref, o_ref, acc_ref = refs
    else:
        a_ref, b_ref, bias_ref, o_ref, acc_ref = refs
        res_ref = None

    k = pl.program_id(2)

    @pl.when(k == 0)
    def _():
        acc_ref[...] = jnp.zeros_like(acc_ref)

    acc_ref[...] += jnp.dot(a_ref[...], b_ref[...],
                            preferred_element_type=jnp.float32)

    @pl.when(k == pl.num_programs(2) - 1)
    def _():
        y = acc_ref[...] + bias_ref[...]          # BN scale already folded into weights
        y = y * jax.nn.sigmoid(y)                 # SiLU (f32 epilogue)
        if res_ref is not None:
            y = y + res_ref[...].astype(jnp.float32)
        o_ref[...] = y.astype(o_ref.dtype)


def _pick_tiles(M, Kp, N):
    """Choose (tm, tk, tn) given M rows, padded K, and (unpadded) N output channels."""
    tm = min(256, _round_up(max(M, 1), 16))       # multiple of 16 for clean bf16 packing
    if N <= 256:
        tn = N                                    # no N padding for 64/128/256-ch layers
    else:
        tn = min(512, N // 2)                     # keep >=2 parallel N blocks (megacore)
    # Largest K tile (multiple of 128 dividing Kp) whose double-buffered bf16 A+B blocks
    # stay within ~24 MB (safe for v7x's 64 MiB VMEM with everything else included).
    budget = 24 * 1024 * 1024
    kunits = Kp // 128
    tk = 128
    for d in range(kunits, 0, -1):
        if kunits % d:
            continue
        cand = d * 128
        if 2 * (tm * cand + cand * tn) * 2 <= budget:
            tk = cand
            break
    return tm, tk, tn


def fused_matmul_bias_silu(a, wm, bias, res=None, out_dtype=jnp.bfloat16):
    """a: (M, K) bf16 patches, wm: (Kp, N) bf16 (BN scale folded, K pre-padded),
    bias: (N,) f32, res: (M, N) bf16 or None."""
    M, K = a.shape
    Kp, N = wm.shape
    tm, tk, tn = _pick_tiles(M, Kp, N)
    Mp = _round_up(M, tm)

    a_p = a
    if Mp > M or Kp > K:
        a_p = jnp.pad(a, ((0, Mp - M), (0, Kp - K)))
    bias2 = bias.reshape(1, N)

    has_res = res is not None
    inputs = [a_p, wm, bias2]
    in_specs = [
        pl.BlockSpec((tm, tk), lambda i, j, k: (i, k)),
        pl.BlockSpec((tk, tn), lambda i, j, k: (k, j)),
        pl.BlockSpec((1, tn), lambda i, j, k: (0, j)),
    ]
    if has_res:
        r = res if Mp == M else jnp.pad(res, ((0, Mp - M), (0, 0)))
        inputs.append(r)
        in_specs.append(pl.BlockSpec((tm, tn), lambda i, j, k: (i, j)))

    out = pl.pallas_call(
        functools.partial(_matmul_bias_silu_kernel, has_res=has_res),
        out_shape=jax.ShapeDtypeStruct((Mp, N), out_dtype),
        grid_spec=pltpu.PrefetchScalarGridSpec(
            num_scalar_prefetch=0,
            grid=(Mp // tm, N // tn, Kp // tk),
            in_specs=in_specs,
            out_specs=pl.BlockSpec((tm, tn), lambda i, j, k: (i, j)),
            scratch_shapes=[pltpu.VMEM((tm, tn), jnp.float32)],
        ),
        compiler_params=pltpu.CompilerParams(
            dimension_semantics=("parallel", "parallel", "arbitrary"),
            vmem_limit_bytes=64 * 1024 * 1024),
    )(*inputs)
    if Mp > M:
        out = out[:M]
    return out


def _maxpool_sep_kernel(xp_ref, o_ref, *, k, H, W):
    """Separable k x k / stride-1 max pool: W pass then H pass (2*(k-1) max ops)."""
    x = xp_ref[...]
    row = x[:, :, 0:W, :]
    for dx in range(1, k):
        row = jnp.maximum(row, x[:, :, dx:dx + W, :])
    out = row[:, 0:H, :, :]
    for dy in range(1, k):
        out = jnp.maximum(out, row[:, dy:dy + H, :, :])
    o_ref[...] = out


def maxpool_same(x, k=5):
    """MaxPool2d(kernel=k, stride=1, padding=k//2) in NHWC."""
    N, H, W, C = x.shape
    p = k // 2
    xp = jnp.pad(x, ((0, 0), (p, p), (p, p), (0, 0)),
                 constant_values=-jnp.inf)
    return pl.pallas_call(
        functools.partial(_maxpool_sep_kernel, k=k, H=H, W=W),
        out_shape=jax.ShapeDtypeStruct((N, H, W, C), x.dtype),
    )(xp)


# ----------------------------------------------------------------------------- conv glue
def _im2col(x, k, s, p):
    """x: NHWC -> (N*Ho*Wo, k*k*C) with K-order (dy, dx, c)."""
    N, H, W, C = x.shape
    if k == 1 and s == 1 and p == 0:
        return x.reshape(N * H * W, C), (N, H, W)
    xp = jnp.pad(x, ((0, 0), (p, p), (p, p), (0, 0)))
    Ho = (H + 2 * p - k) // s + 1
    Wo = (W + 2 * p - k) // s + 1
    cols = []
    for dy in range(k):
        for dx in range(k):
            cols.append(xp[:, dy:dy + s * (Ho - 1) + 1:s,
                           dx:dx + s * (Wo - 1) + 1:s, :])
    patches = jnp.concatenate(cols, axis=-1)
    return patches.reshape(N * Ho * Wo, k * k * C), (N, Ho, Wo)


def conv_forward(p, x, residual=None):
    """Conv2d(no bias) + BatchNorm(eval, scale folded into W) + SiLU.  x: NHWC bf16."""
    patches, (N, Ho, Wo) = _im2col(x, p['k'], p['s'], p['p'])
    c2 = p['wm'].shape[1]
    res_flat = residual.reshape(-1, c2) if residual is not None else None
    out = fused_matmul_bias_silu(patches.astype(jnp.bfloat16), p['wm'],
                                 p['bias'], res_flat)
    return out.reshape(N, Ho, Wo, c2)


# ----------------------------------------------------------------------------- module forwards
def bottleneck_forward(p, x):
    y = conv_forward(p['cv1'], x)
    if p['add']:
        return conv_forward(p['cv2'], y, residual=x)   # x + cv2(cv1(x)), add fused in-kernel
    return conv_forward(p['cv2'], y)


def c3_forward(p, x):
    y1 = conv_forward(p['cv1'], x)
    for bp in p['m']:
        y1 = bottleneck_forward(bp, y1)
    y2 = conv_forward(p['cv2'], x)
    y = jnp.concatenate([y1, y2], axis=-1)             # channel concat (NHWC)
    return conv_forward(p['cv3'], y)


def sppf_forward(p, x):
    x = conv_forward(p['cv1'], x)
    y1 = maxpool_same(x, p['k'])
    y2 = maxpool_same(y1, p['k'])
    y3 = maxpool_same(y2, p['k'])
    y = jnp.concatenate([x, y1, y2, y3], axis=-1)
    return conv_forward(p['cv2'], y)


def cspdarknet_forward(params, x_nchw, multi_scale_outputs=False):
    x = jnp.transpose(x_nchw, (0, 2, 3, 1)).astype(jnp.bfloat16)   # NCHW -> NHWC, bf16
    outputs = []
    for i, (kind, p) in enumerate(params):
        if kind == 'conv':
            x = conv_forward(p, x)
        elif kind == 'c3':
            x = c3_forward(p, x)
        else:
            x = sppf_forward(p, x)
        if i in (4, 6):
            outputs.append(jnp.transpose(x, (0, 3, 1, 2)).astype(jnp.float32))
    out = jnp.transpose(x, (0, 3, 1, 2)).astype(jnp.float32)       # back to NCHW f32
    outputs.append(out)
    return outputs if multi_scale_outputs else out


# ----------------------------------------------------------------------------- parameter init
def make_bn(key, c):
    k1, k2, k3, k4 = jax.random.split(key, 4)
    gamma = 1.0 + 0.1 * jax.random.normal(k1, (c,), jnp.float32)
    beta = 0.1 * jax.random.normal(k2, (c,), jnp.float32)
    mean = 0.1 * jax.random.normal(k3, (c,), jnp.float32)
    var = jax.random.uniform(k4, (c,), jnp.float32, minval=0.5, maxval=1.5)
    eps = 1e-5
    scale = gamma / jnp.sqrt(var + eps)
    bias = beta - mean * scale
    return scale, bias


def make_conv(key, c1, c2, k=1, s=1, p=None):
    """Build Conv+BN params with the matmul weight prepared once:
    (kh,kw,c1,c2) order matching im2col, BN scale folded, K padded to 128, bf16."""
    p = autopad(k, p)
    kw_key, kb_key = jax.random.split(key)
    fan_in = c1 * k * k
    w = jax.random.normal(kw_key, (c2, c1, k, k), jnp.float32) / (fan_in ** 0.5)
    scale, bias = make_bn(kb_key, c2)
    K = k * k * c1
    wm = jnp.transpose(w, (2, 3, 1, 0)).reshape(K, c2) * scale[None, :]
    Kp = _round_up(K, 128)
    if Kp > K:
        wm = jnp.pad(wm, ((0, Kp - K), (0, 0)))
    return {'wm': wm.astype(jnp.bfloat16), 'bias': bias, 'k': k, 's': s, 'p': p}


def make_bottleneck(key, c1, c2, shortcut=True, e=0.5):
    c_ = int(c2 * e)
    k1, k2 = jax.random.split(key)
    return {'cv1': make_conv(k1, c1, c_, 1, 1),
            'cv2': make_conv(k2, c_, c2, 3, 1),
            'add': bool(shortcut and c1 == c2)}


def make_c3(key, c1, c2, n=1, shortcut=True, e=0.5):
    c_ = int(c2 * e)
    keys = jax.random.split(key, 3 + n)
    return {'cv1': make_conv(keys[0], c1, c_, 1, 1),
            'cv2': make_conv(keys[1], c1, c_, 1, 1),
            'cv3': make_conv(keys[2], 2 * c_, c2, 1),
            'm': [make_bottleneck(keys[3 + i], c_, c_, shortcut, e=1.0)
                  for i in range(n)]}


def make_sppf(key, c1, c2, k=5):
    c_ = c1 // 2
    k1, k2 = jax.random.split(key)
    return {'cv1': make_conv(k1, c1, c_, 1, 1),
            'cv2': make_conv(k2, c_ * 4, c2, 1, 1),
            'k': k}


def make_cspdarknet(key):
    keys = jax.random.split(key, 10)
    return [
        ('conv', make_conv(keys[0], 3, 64, 6, 2, 2)),
        ('conv', make_conv(keys[1], 64, 128, 3, 2)),
        ('c3',   make_c3(keys[2], 128, 128, 3)),
        ('conv', make_conv(keys[3], 128, 256, 3, 2)),
        ('c3',   make_c3(keys[4], 256, 256, 6)),
        ('conv', make_conv(keys[5], 256, 512, 3, 2)),
        ('c3',   make_c3(keys[6], 512, 512, 9)),
        ('conv', make_conv(keys[7], 512, 1024, 3, 2)),
        ('c3',   make_c3(keys[8], 1024, 1024, 3)),
        ('sppf', make_sppf(keys[9], 1024, 1024, 5)),
    ]


# ----------------------------------------------------------------------------- main
if __name__ == "__main__":
    root = jax.random.PRNGKey(0)
    k_params, k_x = jax.random.split(root)

    params = make_cspdarknet(k_params)

    # SMALL input consistent with the module (3 input channels, 5 stride-2 stages).
    x = jax.random.normal(k_x, (1, 3, 64, 64), jnp.float32)   # NCHW like PyTorch

    out = cspdarknet_forward(params, x, multi_scale_outputs=False)
    out = jax.block_until_ready(out)

    assert out.shape == (1, 1024, 2, 2), out.shape
    assert out.dtype == jnp.float32
    assert bool(jnp.all(jnp.isfinite(out)))
    print("KERNEL_OK")
</pallas_src>

<mosaic_0001>
module attributes {stable_mosaic.version = 11 : i64} {
  func.func @_matmul_bias_silu_kernel(%arg0: i32, %arg1: i32, %arg2: i32, %arg3: memref<256x128xbf16, #tpu.memory_space<vmem>>, %arg4: memref<128x64xbf16, #tpu.memory_space<vmem>>, %arg5: memref<1x64xf32, #tpu.memory_space<vmem>>, %arg6: memref<256x64xbf16, #tpu.memory_space<vmem>>, %arg7: memref<256x64xf32, #tpu.memory_space<vmem>>) attributes {dimension_semantics = [#tpu.dimension_semantics<parallel>, #tpu.dimension_semantics<parallel>, #tpu.dimension_semantics<arbitrary>], iteration_bounds = array<i64: 4, 1, 1>, scalar_prefetch = 0 : i64, scratch_operands = 1 : i64, tpu.core_type = #tpu.core_type<tc>, window_params = [{transform_indices = @transform_0, window_bounds = array<i64: 256, 128>}, {transform_indices = @transform_1, window_bounds = array<i64: 128, 64>}, {transform_indices = @transform_2, window_bounds = array<i64: 1, 64>}, {transform_indices = @transform_3, window_bounds = array<i64: 256, 64>}]} {
    %c0_i32 = arith.constant 0 : i32
    %0 = arith.cmpi eq, %arg2, %c0_i32 : i32
    %1 = arith.extui %0 : i1 to i32
    %c0_i32_0 = arith.constant 0 : i32
    %2 = arith.cmpi ne, %1, %c0_i32_0 : i32
    scf.if %2 {
      %cst_10 = arith.constant 0.000000e+00 : f32
      %12 = vector.broadcast %cst_10 : f32 to vector<256x64xf32>
      %c0_11 = arith.constant 0 : index
      %c0_12 = arith.constant 0 : index
      %13 = vector.load %arg7[%c0_11, %c0_12] : memref<256x64xf32, #tpu.memory_space<vmem>>, vector<256x64xf32>
      tpu.vector_store %arg7[%c0_11, %c0_12], %12 {strides = array<i32>} : memref<256x64xf32, #tpu.memory_space<vmem>>, vector<256x64xf32>,
    } else {
    }
    %c0 = arith.constant 0 : index
    %c0_1 = arith.constant 0 : index
    %3 = vector.load %arg7[%c0, %c0_1] : memref<256x64xf32, #tpu.memory_space<vmem>>, vector<256x64xf32>
    %c0_2 = arith.constant 0 : index
    %c0_3 = arith.constant 0 : index
    %4 = vector.load %arg3[%c0_2, %c0_3] : memref<256x128xbf16, #tpu.memory_space<vmem>>, vector<256x128xbf16>
    %c0_4 = arith.constant 0 : index
    %c0_5 = arith.constant 0 : index
    %5 = vector.load %arg4[%c0_4, %c0_5] : memref<128x64xbf16, #tpu.memory_space<vmem>>, vector<128x64xbf16>
    %cst = arith.constant dense<0.000000e+00> : vector<256x64xf32>
    %6 = tpu.matmul %4, %5, %cst {dimension_numbers = #tpu.dot_dimension_numbers<[1], [0], [0], [1], [0, 0, 1, 1], [], []>} : vector<256x128xbf16>, vector<128x64xbf16>, vector<256x64xf32> -> vector<256x64xf32>
    %7 = arith.addf %3, %6 : vector<256x64xf32>
    %c0_6 = arith.constant 0 : index
    %c0_7 = arith.constant 0 : index
    %8 = vector.load %arg7[%c0_6, %c0_7] : memref<256x64xf32, #tpu.memory_space<vmem>>, vector<256x64xf32>
    tpu.vector_store %arg7[%c0_6, %c0_7], %7 {strides = array<i32>} : memref<256x64xf32, #tpu.memory_space<vmem>>, vector<256x64xf32>,
    %c0_i32_8 = arith.constant 0 : i32
    %9 = arith.cmpi eq, %arg2, %c0_i32_8 : i32
    %10 = arith.extui %9 : i1 to i32
    %c0_i32_9 = arith.constant 0 : i32
    %11 = arith.cmpi ne, %10, %c0_i32_9 : i32
    scf.if %11 {
      %c0_10 = arith.constant 0 : index
      %c0_11 = arith.constant 0 : index
      %12 = vector.load %arg7[%c0_10, %c0_11] : memref<256x64xf32, #tpu.memory_space<vmem>>, vector<256x64xf32>
      %c0_12 = arith.constant 0 : index
      %c0_13 = arith.constant 0 : index
      %13 = vector.load %arg5[%c0_12, %c0_13] : memref<1x64xf32, #tpu.memory_space<vmem>>, vector<1x64xf32>
      %14 = vector.broadcast %13 : vector<1x64xf32> to vector<256x64xf32>
      %15 = arith.addf %12, %14 : vector<256x64xf32>
      %16 = arith.negf %15 : vector<256x64xf32>
      %17 = math.exp %16 : vector<256x64xf32>
      %cst_14 = arith.constant 1.000000e+00 : f32
      %18 = vector.broadcast %cst_14 : f32 to vector<256x64xf32>
      %19 = arith.addf %18, %17 : vector<256x64xf32>
      %20 = arith.divf %18, %19 : vector<256x64xf32>
      %21 = arith.mulf %15, %20 : vector<256x64xf32>
      %22 = arith.truncf %21 : vector<256x64xf32> to vector<256x64xbf16>
      %c0_15 = arith.constant 0 : index
      %c0_16 = arith.constant 0 : index
      %23 = vector.load %arg6[%c0_15, %c0_16] : memref<256x64xbf16, #tpu.memory_space<vmem>>, vector<256x64xbf16>
      tpu.vector_store %arg6[%c0_15, %c0_16], %22 {strides = array<i32>} : memref<256x64xbf16, #tpu.memory_space<vmem>>, vector<256x64xbf16>,
    } else {
    }
    return
  }
  func.func @transform_0(%arg0: i32, %arg1: i32, %arg2: i32) -> (i32, i32) {
    %c0_i32 = arith.constant 0 : i32
    return %arg0, %arg2 : i32, i32
  }
  func.func @transform_1(%arg0: i32, %arg1: i32, %arg2: i32) -> (i32, i32) {
    %c0_i32 = arith.constant 0 : i32
    return %arg2, %arg1 : i32, i32
  }
  func.func @transform_2(%arg0: i32, %arg1: i32, %arg2: i32) -> (i32, i32) {
    %c0_i32 = arith.constant 0 : i32
    %c0_i32_0 = arith.constant 0 : i32
    return %c0_i32, %arg1 : i32, i32
  }
  func.func @transform_3(%arg0: i32, %arg1: i32, %arg2: i32) -> (i32, i32) {
    %c0_i32 = arith.constant 0 : i32
    return %arg0, %arg1 : i32, i32
  }
}

</mosaic_0001>

<llo_original>
// kernel: tpu_custom_call.1
$region0: #{tpu_custom_call.1}
  #allocation0 [shape = 'u32[]', space=smem, size = 0x4, offset = 0x4, fixed_abs, tag = 'smem constant byte address 0x4 - core index']
  #allocation1 [shape = 'u32[72,128]{1,0:T(1,128)}', space=vmem, size = 0x9000, scoped, tag = 'internal scratch']
  #allocation2 [shape = 'f32[256,64]{1,0:T(8,128)}', space=vmem, size = 0x20000, scoped, tag = 'scratch operand']
  %s0 = inlined_call_operand.hbm [shape: bf16[1024,128], index: 0, kind: input, shape index: {}]
  %s1 = inlined_call_operand.vmem [shape: bf16[128,64], index: 1, kind: input, shape index: {}]
  %s2 = inlined_call_operand.vmem [shape: f32[1,64], index: 2, kind: input, shape index: {}]
  %s3 = inlined_call_operand.vmem [shape: bf16[1024,64], index: 3, kind: output, shape index: {}]
  %s4 = sld [smem:[#allocation0]]
  $region57: #{tpu_custom_call.1} parent=0
    _
  %s6 = ssub.s32 1, %s4
  %s7 = scalar_select 0, %s6, %s4
  $region1: #{tpu_custom_call.1} parent=0
    #allocation3 [shape = 'u8[131072]{0}', space=vmem, size = 0x20000, scoped, tag = 'input window, operand 0']
    #allocation4 [shape = 's32[2]{0}', space=sflag, size = 0x8, scoped, tag = 'scoped memory for tpu_custom_call.1']
    %8 = vsyncpa [#allocation4], 0
    %s9 = scalar_lea.sflag [#allocation4], 1
    %10 = vsyncpa %s9, 0
    loop: start=0, step=1, limit=6
    $region2: #{tpu_custom_call.1} parent=1 // loop_pre_header
      _
    $region3: #{tpu_custom_call.1} parent=1 // loop_header
      %s12 = sphi 0, %s16
      %p13 = scmp.ge.s32.totalorder %s12, 6
      %s19 = sphi 0, %s38
      %s20 = sphi 0, %s34
      %s21 = sphi 0, %s30
      %s22 = sphi 0, %s19
      %s23 = sphi 0, %s20
      %s24 = sphi 0, %s21
      %s25 = sphi 0, %s22
      %s26 = sphi 0, %s23
      %s27 = sphi 0, %s24
      %s43 = sphi 0, %s45
      %s46 = sphi 0, %s43
      %s47 = sphi 0, %s46
      %s63 = sphi 0, %s47
      %s71 = sphi 0, %s73
      %s74 = sphi 0, %s71
      %s75 = sphi 0, %s74
      %s91 = sphi 0, %s75
      %s97 = sphi 0, %s99
      %s100 = sphi 0, %s97
      %s101 = sphi 0, %s100
      %s117 = sphi 0, %s101
      %s125 = sphi 0, %s127
      %s128 = sphi 0, %s125
      %s129 = sphi 0, %s128
      %s145 = sphi 0, %s129
    $region4: #{tpu_custom_call.1} parent=1 // loop_header_branch
      %15 = sbr.rel (%p13) target = $region8
    $region5: #{tpu_custom_call.1} parent=1 // loop_body
      %s17 = ssub.s32 %s12, 1
      %s18 = ssub.s32 %s12, 2
      %s28 = sadd.s32 1, %s21
      %p29 = scmp.ge.s32.totalorder %s28, 1
      %s30 = scalar_select %p29, 0, %s28
      %s31 = sadd.s32 1, %s20
      %s32 = scalar_select %p29, %s31, %s20
      %p33 = scmp.ge.s32.totalorder %s32, 1
      %s34 = scalar_select %p33, 0, %s32
      %s35 = sadd.s32 1, %s19
      %s36 = scalar_select %p33, %s35, %s19
      %p37 = scmp.ge.s32.totalorder %s36, 4
      %s38 = scalar_select %p37, 0, %s36
      %s39 = ssub.s32 %s19, %s38
      %s40 = ssub.s32 %s21, %s30
      %s41 = sor.u32 %s39, %s40
      %p42 = scmp.eq.s32.totalorder %s41, 0
      %s44 = sadd.s32 %s43, 1
      %s45 = scalar_select %p42, %s43, %s44
      %p48 = pneg %p42
      %p49 = scmp.eq.s32.totalorder %s12, 3
      %p50 = por %p48, %p49
      %p51 = scmp.ne.s32.totalorder %s43, %s46
      %p52 = scmp.eq.s32.totalorder %s12, 0
      %p53 = por %p51, %p52
      %p54 = scmp.ne.s32.totalorder %s43, %s46
      %p55 = scmp.eq.s32.totalorder %s17, 3
      %p56 = por %p54, %p55
      %p57 = scmp.ne.s32.totalorder %s46, %s47
      %p58 = scmp.eq.s32.totalorder %s17, 0
      %p59 = por %p57, %p58
      %p60 = scmp.ne.s32.totalorder %s46, %s47
      %p61 = scmp.eq.s32.totalorder %s18, 3
      %p62 = por %p60, %p61
      %p64 = scmp.ne.s32.totalorder %s47, %s63
      %p65 = scmp.eq.s32.totalorder %s18, 0
      %p66 = por %p64, %p65
      %s67 = ssub.s32 %s21, %s30
      %s68 = ssub.s32 %s20, %s34
      %s69 = sor.u32 %s67, %s68
      %p70 = scmp.eq.s32.totalorder %s69, 0
      %s72 = sadd.s32 %s71, 1
      %s73 = scalar_select %p70, %s71, %s72
      %p76 = pneg %p70
      %p77 = scmp.eq.s32.totalorder %s12, 3
      %p78 = por %p76, %p77
      %p79 = scmp.ne.s32.totalorder %s71, %s74
      %p80 = scmp.eq.s32.totalorder %s12, 0
      %p81 = por %p79, %p80
      %p82 = scmp.ne.s32.totalorder %s71, %s74
      %p83 = scmp.eq.s32.totalorder %s17, 3
      %p84 = por %p82, %p83
      %p85 = scmp.ne.s32.totalorder %s74, %s75
      %p86 = scmp.eq.s32.totalorder %s17, 0
      %p87 = por %p85, %p86
      %p88 = scmp.ne.s32.totalorder %s74, %s75
      %p89 = scmp.eq.s32.totalorder %s18, 3
      %p90 = por %p88, %p89
      %p92 = scmp.ne.s32.totalorder %s75, %s91
      %p93 = scmp.eq.s32.totalorder %s18, 0
      %p94 = por %p92, %p93
      %s95 = ssub.s32 %s20, %s34
      %p96 = scmp.eq.s32.totalorder %s95, 0
      %s98 = sadd.s32 %s97, 1
      %s99 = scalar_select %p96, %s97, %s98
      %p102 = pneg %p96
      %p103 = scmp.eq.s32.totalorder %s12, 3
      %p104 = por %p102, %p103
      %p105 = scmp.ne.s32.totalorder %s97, %s100
      %p106 = scmp.eq.s32.totalorder %s12, 0
      %p107 = por %p105, %p106
      %p108 = scmp.ne.s32.totalorder %s97, %s100
      %p109 = scmp.eq.s32.totalorder %s17, 3
      %p110 = por %p108, %p109
      %p111 = scmp.ne.s32.totalorder %s100, %s101
      %p112 = scmp.eq.s32.totalorder %s17, 0
      %p113 = por %p111, %p112
      %p114 = scmp.ne.s32.totalorder %s100, %s101
      %p115 = scmp.eq.s32.totalorder %s18, 3
      %p116 = por %p114, %p115
      %p118 = scmp.ne.s32.totalorder %s101, %s117
      %p119 = scmp.eq.s32.totalorder %s18, 0
      %p120 = por %p118, %p119
      %s121 = ssub.s32 %s19, %s38
      %s122 = ssub.s32 %s20, %s34
      %s123 = sor.u32 %s121, %s122
      %p124 = scmp.eq.s32.totalorder %s123, 0
      %s126 = sadd.s32 %s125, 1
      %s127 = scalar_select %p124, %s125, %s126
      %p130 = pneg %p124
      %p131 = scmp.eq.s32.totalorder %s12, 3
      %p132 = por %p130, %p131
      %p133 = scmp.ne.s32.totalorder %s125, %s128
      %p134 = scmp.eq.s32.totalorder %s12, 0
      %p135 = por %p133, %p134
      %p136 = scmp.ne.s32.totalorder %s125, %s128
      %p137 = scmp.eq.s32.totalorder %s17, 3
      %p138 = por %p136, %p137
      %p139 = scmp.ne.s32.totalorder %s128, %s129
      %p140 = scmp.eq.s32.totalorder %s17, 0
      %p141 = por %p139, %p140
      %p142 = scmp.ne.s32.totalorder %s128, %s129
      %p143 = scmp.eq.s32.totalorder %s18, 3
      %p144 = por %p142, %p143
      %p146 = scmp.ne.s32.totalorder %s129, %s145
      %p147 = scmp.eq.s32.totalorder %s18, 0
      %p148 = por %p146, %p147
      %p149 = scmp.le.s32.totalorder 1, %s12
      %p150 = scmp.lt.s32.totalorder %s12, 5
      %p151 = pnand %p149, %p150
      %p152 = pneg %p151
      // Predicated region
      $region9: #{tpu_custom_call.1} parent=5 // pred_check
        _
      $region10: #{tpu_custom_call.1} parent=5 // pred_check_branch
        %154 = sbr.rel (%p151) target = $region12
      $region11: #{tpu_custom_call.1} parent=5 // pred_region
        %s155 = ssub.s32 %s12, 1
        // Predicated region
        $region13: #{tpu_custom_call.1} parent=11 // pred_check
          %p156 = pneg %p87
        $region14: #{tpu_custom_call.1} parent=11 // pred_check_branch
          %158 = sbr.rel (%p156) target = $region16
        $region15: #{tpu_custom_call.1} parent=11 // pred_region
          %s159 = smul.u32 16, %s24
          %p160 = scmp.lt.s32.totalorder %s159, 15
          %s161 = scalar_select %p160, %s159, 15
          %p162 = scmp.lt.s32.totalorder %s23, 0
          %s163 = scalar_select %p162, %s23, 0
          %s164 = sadd.s32 %s163, %s161
          %s165 = smul.addr %s164, 4
          %s166 = scalar_lea.vmem %s1, %s165
          %s167 = smul.u32 16, %s24
        $region16: #{tpu_custom_call.1} parent=11 // pred_fallthru
          _
        // Predicated region
        $region17: #{tpu_custom_call.1} parent=11 // pred_check
          %p168 = pneg %p113
        $region18: #{tpu_custom_call.1} parent=11 // pred_check_branch
          %170 = sbr.rel (%p168) target = $region20
        $region19: #{tpu_custom_call.1} parent=11 // pred_region
          %p171 = scmp.lt.s32.totalorder %s23, 0
          %s172 = scalar_select %p171, %s23, 0
          %s173 = scalar_lea.vmem %s2, %s172
        $region20: #{tpu_custom_call.1} parent=11 // pred_fallthru
          _
      $region12: #{tpu_custom_call.1} parent=5 // pred_fallthru
        _
      %p174 = scmp.lt.s32.totalorder %s12, 4
      // Predicated region
      $region21: #{tpu_custom_call.1} parent=5 // pred_check
        %p175 = pneg %p174
      $region22: #{tpu_custom_call.1} parent=5 // pred_check_branch
        %177 = sbr.rel (%p175) target = $region24
      $region23: #{tpu_custom_call.1} parent=5 // pred_region
        // Predicated region
        $region25: #{tpu_custom_call.1} parent=23 // pred_check
          %p178 = pneg %p53
        $region26: #{tpu_custom_call.1} parent=23 // pred_check_branch
          %180 = sbr.rel (%p178) target = $region28
        $region27: #{tpu_custom_call.1} parent=23 // pred_region
          %s181 = sand.u32 %s43, 1
          %s182 = scalar_lea.sflag [#allocation4], %s181
          %s183 = sand.u32 %s43, 1
          %s184 = smul.addr %s183, 128
          %s185 = scalar_lea.vmem [#allocation3], %s184
          %s186 = smul.u32 32, %s19
          %188 = vsyncadd %s182, 0
          %s189 = sadd.s32 %s21, %s186
          %s190 = smul.addr %s189, 4
          %s191 = scalar_lea.hbm %s0, %s190
          %s192 = sshll.u32 %s191, 4
          %s193 = int_to_ptr.hbm [resolvable:$true] %s192
          %s194 = sshll.u32 %s185, 4
          %s195 = int_to_ptr.vmem [resolvable:$true] %s194
          %200 = dma.hbm_to_vmem [thread:$0]  %s193, 2048, %s195, %s182, 64, 64, 4
        $region28: #{tpu_custom_call.1} parent=23 // pred_fallthru
          _
      $region24: #{tpu_custom_call.1} parent=5 // pred_fallthru
        _
      %p201 = scmp.le.s32.totalorder 1, %s12
      %p202 = scmp.lt.s32.totalorder %s12, 5
      %p203 = pnand %p201, %p202
      %p204 = pneg %p203
      // Predicated region
      $region29: #{tpu_custom_call.1} parent=5 // pred_check
        _
      $region30: #{tpu_custom_call.1} parent=5 // pred_check_branch
        %206 = sbr.rel (%p203) target = $region32
      $region31: #{tpu_custom_call.1} parent=5 // pred_region
        %s207 = ssub.s32 %s12, 1
        %s208 = sand.u32 %s46, 1
        %s209 = scalar_lea.sflag [#allocation4], %s208
        %s210 = sand.u32 %s46, 1
        %s211 = smul.addr %s210, 128
        %s212 = scalar_lea.vmem [#allocation3], %s211
        // Predicated region
        $region33: #{tpu_custom_call.1} parent=31 // pred_check
          %p213 = pneg %p59
        $region34: #{tpu_custom_call.1} parent=31 // pred_check_branch
          %215 = sbr.rel (%p213) target = $region36
        $region35: #{tpu_custom_call.1} parent=31 // pred_region
          %217 = dma.done %s209, 2048
        $region36: #{tpu_custom_call.1} parent=31 // pred_fallthru
          _
        %s218 = sand.u32 %s46, 1
        %s219 = scalar_lea.sflag [#allocation4], %s218
        %s220 = sand.u32 %s46, 1
        %s221 = smul.addr %s220, 128
        %s222 = scalar_lea.vmem [#allocation3], %s221
        %p223 = pneg %p59
        %p224 = pneg %p56
        %s225 = smul.u32 16, %s24
        %p226 = scmp.lt.s32.totalorder %s225, 15
        %s227 = scalar_select %p226, %s225, 15
        %p228 = scmp.lt.s32.totalorder %s23, 0
        %s229 = scalar_select %p228, %s23, 0
        %s230 = sadd.s32 %s229, %s227
        %s231 = smul.addr %s230, 4
        %s232 = scalar_lea.vmem %s1, %s231
        %p233 = pneg %p87
        %p234 = pneg %p84
        %p235 = scmp.lt.s32.totalorder %s23, 0
        %s236 = scalar_select %p235, %s23, 0
        %s237 = scalar_lea.vmem %s2, %s236
        %p238 = pneg %p113
        %p239 = pneg %p110
        %p240 = pneg %p141
        %p241 = pneg %p138
        %s242 = smul.u32 32, %s22
        %p243 = scmp.lt.s32.totalorder %s242, 127
        %s244 = scalar_select %p243, %s242, 127
        %p245 = scmp.lt.s32.totalorder %s23, 0
        %s246 = scalar_select %p245, %s23, 0
        %s247 = sadd.s32 %s246, %s244
        %s248 = smul.addr %s247, 4
        %s249 = scalar_lea.vmem %s3, %s248
        %s250 = smul.u32 32, %s22
        %s251 = smul.u32 16, %s24
        %p252 = scmp.lt.s32.totalorder %s251, 15
        %s253 = scalar_select %p252, %s251, 15
        %p254 = scmp.lt.s32.totalorder %s23, 0
        %s255 = scalar_select %p254, %s23, 0
        %s256 = sadd.s32 %s255, %s253
        %s257 = smul.addr %s256, 4
        %s258 = scalar_lea.vmem %s1, %s257
        %s259 = smul.u32 16, %s24
        %p260 = scmp.lt.s32.totalorder %s23, 0
        %s261 = scalar_select %p260, %s23, 0
        %s262 = scalar_lea.vmem %s2, %s261
        %s263 = smul.u32 32, %s22
        %p264 = scmp.lt.s32.totalorder %s263, 127
        %s265 = scalar_select %p264, %s263, 127
        %p266 = scmp.lt.s32.totalorder %s23, 0
        %s267 = scalar_select %p266, %s23, 0
        %s268 = sadd.s32 %s267, %s265
        %s269 = smul.addr %s268, 4
        %s270 = scalar_lea.vmem %s3, %s269
        %s271 = smul.u32 32, %s22
        %p272 = scmp.eq.s32.totalorder %s24, 0
        // Predicated region
        $region37: #{tpu_custom_call.1} parent=31 // pred_check
          %p273 = pneg %p272
        $region38: #{tpu_custom_call.1} parent=31 // pred_check_branch
          %275 = sbr.rel (%p273) target = $region40
        $region39: #{tpu_custom_call.1} parent=31 // pred_region
          %vm276 = vcmask 523264
          %277 = vst.msk [vmem:[#allocation2] sm:$0xff] %vm276, 0.0
          %278 = vst.msk [vmem:[#allocation2 + $0x8] sm:$0xff] %vm276, 0.0
          %279 = vst.msk [vmem:[#allocation2 + $0x10] sm:$0xff] %vm276, 0.0
          %280 = vst.msk [vmem:[#allocation2 + $0x18] sm:$0xff] %vm276, 0.0
          %281 = vst.msk [vmem:[#allocation2 + $0x20] sm:$0xff] %vm276, 0.0
          %282 = vst.msk [vmem:[#allocation2 + $0x28] sm:$0xff] %vm276, 0.0
          %283 = vst.msk [vmem:[#allocation2 + $0x30] sm:$0xff] %vm276, 0.0
          %284 = vst.msk [vmem:[#allocation2 + $0x38] sm:$0xff] %vm276, 0.0
          %285 = vst.msk [vmem:[#allocation2 + $0x40] sm:$0xff] %vm276, 0.0
          %286 = vst.msk [vmem:[#allocation2 + $0x48] sm:$0xff] %vm276, 0.0
          %287 = vst.msk [vmem:[#allocation2 + $0x50] sm:$0xff] %vm276, 0.0
          %288 = vst.msk [vmem:[#allocation2 + $0x58] sm:$0xff] %vm276, 0.0
          %289 = vst.msk [vmem:[#allocation2 + $0x60] sm:$0xff] %vm276, 0.0
          %290 = vst.msk [vmem:[#allocation2 + $0x68] sm:$0xff] %vm276, 0.0
          %291 = vst.msk [vmem:[#allocation2 + $0x70] sm:$0xff] %vm276, 0.0
          %292 = vst.msk [vmem:[#allocation2 + $0x78] sm:$0xff] %vm276, 0.0
          %293 = vst.msk [vmem:[#allocation2 + $0x80] sm:$0xff] %vm276, 0.0
          %294 = vst.msk [vmem:[#allocation2 + $0x88] sm:$0xff] %vm276, 0.0
          %295 = vst.msk [vmem:[#allocation2 + $0x90] sm:$0xff] %vm276, 0.0
          %296 = vst.msk [vmem:[#allocation2 + $0x98] sm:$0xff] %vm276, 0.0
          %297 = vst.msk [vmem:[#allocation2 + $0xa0] sm:$0xff] %vm276, 0.0
          %298 = vst.msk [vmem:[#allocation2 + $0xa8] sm:$0xff] %vm276, 0.0
          %299 = vst.msk [vmem:[#allocation2 + $0xb0] sm:$0xff] %vm276, 0.0
          %300 = vst.msk [vmem:[#allocation2 + $0xb8] sm:$0xff] %vm276, 0.0
          %301 = vst.msk [vmem:[#allocation2 + $0xc0] sm:$0xff] %vm276, 0.0
          %302 = vst.msk [vmem:[#allocation2 + $0xc8] sm:$0xff] %vm276, 0.0
          %303 = vst.msk [vmem:[#allocation2 + $0xd0] sm:$0xff] %vm276, 0.0
          %304 = vst.msk [vmem:[#allocation2 + $0xd8] sm:$0xff] %vm276, 0.0
          %305 = vst.msk [vmem:[#allocation2 + $0xe0] sm:$0xff] %vm276, 0.0
          %306 = vst.msk [vmem:[#allocation2 + $0xe8] sm:$0xff] %vm276, 0.0
          %307 = vst.msk [vmem:[#allocation2 + $0xf0] sm:$0xff] %vm276, 0.0
          %308 = vst.msk [vmem:[#allocation2 + $0xf8] sm:$0xff] %vm276, 0.0
        $region40: #{tpu_custom_call.1} parent=31 // pred_fallthru
          _
        %v309 = vld [vmem:[#allocation2] sm:$0xff]
        %v310 = vld [vmem:[#allocation2 + $0x8] sm:$0xff]
        %v311 = vld [vmem:[#allocation2 + $0x10] sm:$0xff]
        %v312 = vld [vmem:[#allocation2 + $0x18] sm:$0xff]
        %v313 = vld [vmem:[#allocation2 + $0x20] sm:$0xff]
        %v314 = vld [vmem:[#allocation2 + $0x28] sm:$0xff]
        %v315 = vld [vmem:[#allocation2 + $0x30] sm:$0xff]
        %v316 = vld [vmem:[#allocation2 + $0x38] sm:$0xff]
        %v317 = vld [vmem:[#allocation2 + $0x40] sm:$0xff]
        %v318 = vld [vmem:[#allocation2 + $0x48] sm:$0xff]
        %v319 = vld [vmem:[#allocation2 + $0x50] sm:$0xff]
        %v320 = vld [vmem:[#allocation2 + $0x58] sm:$0xff]
        %v321 = vld [vmem:[#allocation2 + $0x60] sm:$0xff]
        %v322 = vld [vmem:[#allocation2 + $0x68] sm:$0xff]
        %v323 = vld [vmem:[#allocation2 + $0x70] sm:$0xff]
        %v324 = vld [vmem:[#allocation2 + $0x78] sm:$0xff]
        %v325 = vld [vmem:[#allocation2 + $0x80] sm:$0xff]
        %v326 = vld [vmem:[#allocation2 + $0x88] sm:$0xff]
        %v327 = vld [vmem:[#allocation2 + $0x90] sm:$0xff]
        %v328 = vld [vmem:[#allocation2 + $0x98] sm:$0xff]
        %v329 = vld [vmem:[#allocation2 + $0xa0] sm:$0xff]
        %v330 = vld [vmem:[#allocation2 + $0xa8] sm:$0xff]
        %v331 = vld [vmem:[#allocation2 + $0xb0] sm:$0xff]
        %v332 = vld [vmem:[#allocation2 + $0xb8] sm:$0xff]
        %v333 = vld [vmem:[#allocation2 + $0xc0] sm:$0xff]
        %v334 = vld [vmem:[#allocation2 + $0xc8] sm:$0xff]
        %v335 = vld [vmem:[#allocation2 + $0xd0] sm:$0xff]
        %v336 = vld [vmem:[#allocation2 + $0xd8] sm:$0xff]
        %v337 = vld [vmem:[#allocation2 + $0xe0] sm:$0xff]
        %v338 = vld [vmem:[#allocation2 + $0xe8] sm:$0xff]
        %v339 = vld [vmem:[#allocation2 + $0xf0] sm:$0xff]
        %v340 = vld [vmem:[#allocation2 + $0xf8] sm:$0xff]
        %v341 = vld [vmem:[%s212] sm:$0xf]
        %v342 = vld [vmem:[%s212 + $0x4] sm:$0xf]
        %v343 = vld [vmem:[%s212 + $0x8] sm:$0xf]
        %v344 = vld [vmem:[%s212 + $0xc] sm:$0xf]
        %v345 = vld [vmem:[%s212 + $0x10] sm:$0xf]
        %v346 = vld [vmem:[%s212 + $0x14] sm:$0xf]
        %v347 = vld [vmem:[%s212 + $0x18] sm:$0xf]
        %v348 = vld [vmem:[%s212 + $0x1c] sm:$0xf]
        %v349 = vld [vmem:[%s212 + $0x20] sm:$0xf]
        %v350 = vld [vmem:[%s212 + $0x24] sm:$0xf]
        %v351 = vld [vmem:[%s212 + $0x28] sm:$0xf]
        %v352 = vld [vmem:[%s212 + $0x2c] sm:$0xf]
        %v353 = vld [vmem:[%s212 + $0x30] sm:$0xf]
        %v354 = vld [vmem:[%s212 + $0x34] sm:$0xf]
        %v355 = vld [vmem:[%s212 + $0x38] sm:$0xf]
        %v356 = vld [vmem:[%s212 + $0x3c] sm:$0xf]
        %v357 = vld [vmem:[%s212 + $0x40] sm:$0xf]
        %v358 = vld [vmem:[%s212 + $0x44] sm:$0xf]
        %v359 = vld [vmem:[%s212 + $0x48] sm:$0xf]
        %v360 = vld [vmem:[%s212 + $0x4c] sm:$0xf]
        %v361 = vld [vmem:[%s212 + $0x50] sm:$0xf]
        %v362 = vld [vmem:[%s212 + $0x54] sm:$0xf]
        %v363 = vld [vmem:[%s212 + $0x58] sm:$0xf]
        %v364 = vld [vmem:[%s212 + $0x5c] sm:$0xf]
        %v365 = vld [vmem:[%s212 + $0x60] sm:$0xf]
        %v366 = vld [vmem:[%s212 + $0x64] sm:$0xf]
        %v367 = vld [vmem:[%s212 + $0x68] sm:$0xf]
        %v368 = vld [vmem:[%s212 + $0x6c] sm:$0xf]
        %v369 = vld [vmem:[%s212 + $0x70] sm:$0xf]
        %v370 = vld [vmem:[%s212 + $0x74] sm:$0xf]
        %v371 = vld [vmem:[%s212 + $0x78] sm:$0xf]
        %v372 = vld [vmem:[%s212 + $0x7c] sm:$0xf]
        %v373 = vld [vmem:[%s258] sm:$0xf]
        %v374 = vld [vmem:[%s258 + $0x4] sm:$0xf]
        %v375 = vld [vmem:[%s258 + $0x8] sm:$0xf]
        %v376 = vld [vmem:[%s258 + $0xc] sm:$0xf]
        %v377 = vld [vmem:[%s258 + $0x10] sm:$0xf]
        %v378 = vld [vmem:[%s258 + $0x14] sm:$0xf]
        %v379 = vld [vmem:[%s258 + $0x18] sm:$0xf]
        %v380 = vld [vmem:[%s258 + $0x1c] sm:$0xf]
        %v381 = vld [vmem:[%s258 + $0x20] sm:$0xf]
        %v382 = vld [vmem:[%s258 + $0x24] sm:$0xf]
        %v383 = vld [vmem:[%s258 + $0x28] sm:$0xf]
        %v384 = vld [vmem:[%s258 + $0x2c] sm:$0xf]
        %v385 = vld [vmem:[%s258 + $0x30] sm:$0xf]
        %v386 = vld [vmem:[%s258 + $0x34] sm:$0xf]
        %v387 = vld [vmem:[%s258 + $0x38] sm:$0xf]
        %v388 = vld [vmem:[%s258 + $0x3c] sm:$0xf]
        %v421 = vunpack.c.l.b16 %v341
        %v422 = vunpack.c.l.b16 %v342
        %v423 = vunpack.c.l.b16 %v343
        %v424 = vunpack.c.l.b16 %v344
        %v425 = vunpack.c.l.b16 %v345
        %v426 = vunpack.c.l.b16 %v346
        %v427 = vunpack.c.l.b16 %v347
        %v428 = vunpack.c.l.b16 %v348
        %v429 = vunpack.c.l.b16 %v349
        %v430 = vunpack.c.l.b16 %v350
        %v431 = vunpack.c.l.b16 %v351
        %v432 = vunpack.c.l.b16 %v352
        %v433 = vunpack.c.l.b16 %v353
        %v434 = vunpack.c.l.b16 %v354
        %v435 = vunpack.c.l.b16 %v355
        %v436 = vunpack.c.l.b16 %v356
        %v437 = vunpack.c.l.b16 %v357
        %v438 = vunpack.c.l.b16 %v358
        %v439 = vunpack.c.l.b16 %v359
        %v440 = vunpack.c.l.b16 %v360
        %v441 = vunpack.c.l.b16 %v361
        %v442 = vunpack.c.l.b16 %v362
        %v443 = vunpack.c.l.b16 %v363
        %v444 = vunpack.c.l.b16 %v364
        %v445 = vunpack.c.l.b16 %v365
        %v446 = vunpack.c.l.b16 %v366
        %v447 = vunpack.c.l.b16 %v367
        %v448 = vunpack.c.l.b16 %v368
        %v449 = vunpack.c.l.b16 %v369
        %v450 = vunpack.c.l.b16 %v370
        %v451 = vunpack.c.l.b16 %v371
        %v452 = vunpack.c.l.b16 %v372
        %v453 = vpack.c.b16 %v422, %v421
        %v454 = vpack.c.b16 %v424, %v423
        %v455 = vpack.c.b16 %v426, %v425
        %v456 = vpack.c.b16 %v428, %v427
        %v457 = vpack.c.b16 %v430, %v429
        %v458 = vpack.c.b16 %v432, %v431
        %v459 = vpack.c.b16 %v434, %v433
        %v460 = vpack.c.b16 %v436, %v435
        %v461 = vpack.c.b16 %v438, %v437
        %v462 = vpack.c.b16 %v440, %v439
        %v463 = vpack.c.b16 %v442, %v441
        %v464 = vpack.c.b16 %v444, %v443
        %v465 = vpack.c.b16 %v446, %v445
        %v466 = vpack.c.b16 %v448, %v447
        %v467 = vpack.c.b16 %v450, %v449
        %v468 = vpack.c.b16 %v452, %v451
        %v501 = vunpack.c.l.b16 %v373
        %v502 = vunpack.c.l.b16 %v374
        %v503 = vunpack.c.l.b16 %v375
        %v504 = vunpack.c.l.b16 %v376
        %v505 = vunpack.c.l.b16 %v377
        %v506 = vunpack.c.l.b16 %v378
        %v507 = vunpack.c.l.b16 %v379
        %v508 = vunpack.c.l.b16 %v380
        %v509 = vunpack.c.l.b16 %v381
        %v510 = vunpack.c.l.b16 %v382
        %v511 = vunpack.c.l.b16 %v383
        %v512 = vunpack.c.l.b16 %v384
        %v513 = vunpack.c.l.b16 %v385
        %v514 = vunpack.c.l.b16 %v386
        %v515 = vunpack.c.l.b16 %v387
        %v516 = vunpack.c.l.b16 %v388
        %v517 = vpack.c.b16 %v502, %v501
        %v518 = vpack.c.b16 %v504, %v503
        %v519 = vpack.c.b16 %v506, %v505
        %v520 = vpack.c.b16 %v508, %v507
        %v521 = vpack.c.b16 %v510, %v509
        %v522 = vpack.c.b16 %v512, %v511
        %v523 = vpack.c.b16 %v514, %v513
        %v524 = vpack.c.b16 %v516, %v515
        %533 = vmatpush.bf16.msra.mxu0 %v524
        %534 = vmatpush.bf16.msra.mxu0 %v523
        %535 = vmatpush.bf16.msra.mxu0 %v522
        %536 = vmatpush.bf16.msra.mxu0 %v521
        %537 = vmatpush.bf16.msra.mxu0 %v520
        %538 = vmatpush.bf16.msra.mxu0 %v519
        %539 = vmatpush.bf16.msra.mxu0 %v518
        %540 = vmatpush.bf16.msra.mxu0 %v517
        %541 = vmatmul.bf16.gmra.mxu0 %v453
        %v542 = vpop.f32.mrf.mxu0
        %v543 = vadd.f32 0.0, %v542
        %v544 = vpop.f32.mrf.mxu0
        %v545 = vadd.f32 0.0, %v544
        %546 = vmatmul.bf16.gmra.mxu0 %v454
        %v547 = vpop.f32.mrf.mxu0
        %v548 = vadd.f32 0.0, %v547
        %v549 = vpop.f32.mrf.mxu0
        %v550 = vadd.f32 0.0, %v549
        %551 = vmatmul.bf16.gmra.mxu0 %v455
        %v552 = vpop.f32.mrf.mxu0
        %v553 = vadd.f32 0.0, %v552
        %v554 = vpop.f32.mrf.mxu0
        %v555 = vadd.f32 0.0, %v554
        %556 = vmatmul.bf16.gmra.mxu0 %v456
        %v557 = vpop.f32.mrf.mxu0
        %v558 = vadd.f32 0.0, %v557
        %v559 = vpop.f32.mrf.mxu0
        %v560 = vadd.f32 0.0, %v559
        %561 = vmatmul.bf16.gmra.mxu0 %v457
        %v562 = vpop.f32.mrf.mxu0
        %v563 = vadd.f32 0.0, %v562
        %v564 = vpop.f32.mrf.mxu0
        %v565 = vadd.f32 0.0, %v564
        %566 = vmatmul.bf16.gmra.mxu0 %v458
        %v567 = vpop.f32.mrf.mxu0
        %v568 = vadd.f32 0.0, %v567
        %v569 = vpop.f32.mrf.mxu0
        %v570 = vadd.f32 0.0, %v569
        %571 = vmatmul.bf16.gmra.mxu0 %v459
        %v572 = vpop.f32.mrf.mxu0
        %v573 = vadd.f32 0.0, %v572
        %v574 = vpop.f32.mrf.mxu0
        %v575 = vadd.f32 0.0, %v574
        %576 = vmatmul.bf16.gmra.mxu0 %v460
        %v577 = vpop.f32.mrf.mxu0
        %v578 = vadd.f32 0.0, %v577
        %v579 = vpop.f32.mrf.mxu0
        %v580 = vadd.f32 0.0, %v579
        %581 = vmatmul.bf16.gmra.mxu0 %v461
        %v582 = vpop.f32.mrf.mxu0
        %v583 = vadd.f32 0.0, %v582
        %v584 = vpop.f32.mrf.mxu0
        %v585 = vadd.f32 0.0, %v584
        %586 = vmatmul.bf16.gmra.mxu0 %v462
        %v587 = vpop.f32.mrf.mxu0
        %v588 = vadd.f32 0.0, %v587
        %v589 = vpop.f32.mrf.mxu0
        %v590 = vadd.f32 0.0, %v589
        %591 = vmatmul.bf16.gmra.mxu0 %v463
        %v592 = vpop.f32.mrf.mxu0
        %v593 = vadd.f32 0.0, %v592
        %v594 = vpop.f32.mrf.mxu0
        %v595 = vadd.f32 0.0, %v594
        %596 = vmatmul.bf16.gmra.mxu0 %v464
        %v597 = vpop.f32.mrf.mxu0
        %v598 = vadd.f32 0.0, %v597
        %v599 = vpop.f32.mrf.mxu0
        %v600 = vadd.f32 0.0, %v599
        %601 = vmatmul.bf16.gmra.mxu0 %v465
        %v602 = vpop.f32.mrf.mxu0
        %v603 = vadd.f32 0.0, %v602
        %v604 = vpop.f32.mrf.mxu0
        %v605 = vadd.f32 0.0, %v604
        %606 = vmatmul.bf16.gmra.mxu0 %v466
        %v607 = vpop.f32.mrf.mxu0
        %v608 = vadd.f32 0.0, %v607
        %v609 = vpop.f32.mrf.mxu0
        %v610 = vadd.f32 0.0, %v609
        %611 = vmatmul.bf16.gmra.mxu0 %v467
        %v612 = vpop.f32.mrf.mxu0
        %v613 = vadd.f32 0.0, %v612
        %v614 = vpop.f32.mrf.mxu0
        %v615 = vadd.f32 0.0, %v614
        %616 = vmatmul.bf16.gmra.mxu0 %v468
        %v617 = vpop.f32.mrf.mxu0
        %v618 = vadd.f32 0.0, %v617
        %v619 = vpop.f32.mrf.mxu0
        %v620 = vadd.f32 0.0, %v619
        %621 = vdwg.mxu0
        %v622 = vadd.f32 %v309, %v543
        %v623 = vadd.f32 %v310, %v545
        %v624 = vadd.f32 %v311, %v548
        %v625 = vadd.f32 %v312, %v550
        %v626 = vadd.f32 %v313, %v553
        %v627 = vadd.f32 %v314, %v555
        %v628 = vadd.f32 %v315, %v558
        %v629 = vadd.f32 %v316, %v560
        %v630 = vadd.f32 %v317, %v563
        %v631 = vadd.f32 %v318, %v565
        %v632 = vadd.f32 %v319, %v568
        %v633 = vadd.f32 %v320, %v570
        %v634 = vadd.f32 %v321, %v573
        %v635 = vadd.f32 %v322, %v575
        %v636 = vadd.f32 %v323, %v578
        %v637 = vadd.f32 %v324, %v580
        %v638 = vadd.f32 %v325, %v583
        %v639 = vadd.f32 %v326, %v585
        %v640 = vadd.f32 %v327, %v588
        %v641 = vadd.f32 %v328, %v590
        %v642 = vadd.f32 %v329, %v593
        %v643 = vadd.f32 %v330, %v595
        %v644 = vadd.f32 %v331, %v598
        %v645 = vadd.f32 %v332, %v600
        %v646 = vadd.f32 %v333, %v603
        %v647 = vadd.f32 %v334, %v605
        %v648 = vadd.f32 %v335, %v608
        %v649 = vadd.f32 %v336, %v610
        %v650 = vadd.f32 %v337, %v613
        %v651 = vadd.f32 %v338, %v615
        %v652 = vadd.f32 %v339, %v618
        %v653 = vadd.f32 %v340, %v620
        %vm654 = vcmask 523264
        %655 = vst.msk [vmem:[#allocation2] sm:$0xff] %vm654, %v622
        %656 = vst.msk [vmem:[#allocation2 + $0x8] sm:$0xff] %vm654, %v623
        %657 = vst.msk [vmem:[#allocation2 + $0x10] sm:$0xff] %vm654, %v624
        %658 = vst.msk [vmem:[#allocation2 + $0x18] sm:$0xff] %vm654, %v625
        %659 = vst.msk [vmem:[#allocation2 + $0x20] sm:$0xff] %vm654, %v626
        %660 = vst.msk [vmem:[#allocation2 + $0x28] sm:$0xff] %vm654, %v627
        %661 = vst.msk [vmem:[#allocation2 + $0x30] sm:$0xff] %vm654, %v628
        %662 = vst.msk [vmem:[#allocation2 + $0x38] sm:$0xff] %vm654, %v629
        %663 = vst.msk [vmem:[#allocation2 + $0x40] sm:$0xff] %vm654, %v630
        %664 = vst.msk [vmem:[#allocation2 + $0x48] sm:$0xff] %vm654, %v631
        %665 = vst.msk [vmem:[#allocation2 + $0x50] sm:$0xff] %vm654, %v632
        %666 = vst.msk [vmem:[#allocation2 + $0x58] sm:$0xff] %vm654, %v633
        %667 = vst.msk [vmem:[#allocation2 + $0x60] sm:$0xff] %vm654, %v634
        %668 = vst.msk [vmem:[#allocation2 + $0x68] sm:$0xff] %vm654, %v635
        %669 = vst.msk [vmem:[#allocation2 + $0x70] sm:$0xff] %vm654, %v636
        %670 = vst.msk [vmem:[#allocation2 + $0x78] sm:$0xff] %vm654, %v637
        %671 = vst.msk [vmem:[#allocation2 + $0x80] sm:$0xff] %vm654, %v638
        %672 = vst.msk [vmem:[#allocation2 + $0x88] sm:$0xff] %vm654, %v639
        %673 = vst.msk [vmem:[#allocation2 + $0x90] sm:$0xff] %vm654, %v640
        %674 = vst.msk [vmem:[#allocation2 + $0x98] sm:$0xff] %vm654, %v641
        %675 = vst.msk [vmem:[#allocation2 + $0xa0] sm:$0xff] %vm654, %v642
        %676 = vst.msk [vmem:[#allocation2 + $0xa8] sm:$0xff] %vm654, %v643
        %677 = vst.msk [vmem:[#allocation2 + $0xb0] sm:$0xff] %vm654, %v644
        %678 = vst.msk [vmem:[#allocation2 + $0xb8] sm:$0xff] %vm654, %v645
        %679 = vst.msk [vmem:[#allocation2 + $0xc0] sm:$0xff] %vm654, %v646
        %680 = vst.msk [vmem:[#allocation2 + $0xc8] sm:$0xff] %vm654, %v647
        %681 = vst.msk [vmem:[#allocation2 + $0xd0] sm:$0xff] %vm654, %v648
        %682 = vst.msk [vmem:[#allocation2 + $0xd8] sm:$0xff] %vm654, %v649
        %683 = vst.msk [vmem:[#allocation2 + $0xe0] sm:$0xff] %vm654, %v650
        %684 = vst.msk [vmem:[#allocation2 + $0xe8] sm:$0xff] %vm654, %v651
        %685 = vst.msk [vmem:[#allocation2 + $0xf0] sm:$0xff] %vm654, %v652
        %686 = vst.msk [vmem:[#allocation2 + $0xf8] sm:$0xff] %vm654, %v653
        // Predicated region
        $region41: #{tpu_custom_call.1} parent=31 // pred_check
          %p687 = pneg %p272
        $region42: #{tpu_custom_call.1} parent=31 // pred_check_branch
          %689 = sbr.rel (%p687) target = $region44
        $region43: #{tpu_custom_call.1} parent=31 // pred_region
          %v690 = vld [vmem:[#allocation2] sm:$0xff]
          %v691 = vld [vmem:[#allocation2 + $0x8] sm:$0xff]
          %v692 = vld [vmem:[#allocation2 + $0x10] sm:$0xff]
          %v693 = vld [vmem:[#allocation2 + $0x18] sm:$0xff]
          %v694 = vld [vmem:[#allocation2 + $0x20] sm:$0xff]
          %v695 = vld [vmem:[#allocation2 + $0x28] sm:$0xff]
          %v696 = vld [vmem:[#allocation2 + $0x30] sm:$0xff]
          %v697 = vld [vmem:[#allocation2 + $0x38] sm:$0xff]
          %v698 = vld [vmem:[#allocation2 + $0x40] sm:$0xff]
          %v699 = vld [vmem:[#allocation2 + $0x48] sm:$0xff]
          %v700 = vld [vmem:[#allocation2 + $0x50] sm:$0xff]
          %v701 = vld [vmem:[#allocation2 + $0x58] sm:$0xff]
          %v702 = vld [vmem:[#allocation2 + $0x60] sm:$0xff]
          %v703 = vld [vmem:[#allocation2 + $0x68] sm:$0xff]
          %v704 = vld [vmem:[#allocation2 + $0x70] sm:$0xff]
          %v705 = vld [vmem:[#allocation2 + $0x78] sm:$0xff]
          %v706 = vld [vmem:[#allocation2 + $0x80] sm:$0xff]
          %v707 = vld [vmem:[#allocation2 + $0x88] sm:$0xff]
          %v708 = vld [vmem:[#allocation2 + $0x90] sm:$0xff]
          %v709 = vld [vmem:[#allocation2 + $0x98] sm:$0xff]
          %v710 = vld [vmem:[#allocation2 + $0xa0] sm:$0xff]
          %v711 = vld [vmem:[#allocation2 + $0xa8] sm:$0xff]
          %v712 = vld [vmem:[#allocation2 + $0xb0] sm:$0xff]
          %v713 = vld [vmem:[#allocation2 + $0xb8] sm:$0xff]
          %v714 = vld [vmem:[#allocation2 + $0xc0] sm:$0xff]
          %v715 = vld [vmem:[#allocation2 + $0xc8] sm:$0xff]
          %v716 = vld [vmem:[#allocation2 + $0xd0] sm:$0xff]
          %v717 = vld [vmem:[#allocation2 + $0xd8] sm:$0xff]
          %v718 = vld [vmem:[#allocation2 + $0xe0] sm:$0xff]
          %v719 = vld [vmem:[#allocation2 + $0xe8] sm:$0xff]
          %v720 = vld [vmem:[#allocation2 + $0xf0] sm:$0xff]
          %v721 = vld [vmem:[#allocation2 + $0xf8] sm:$0xff]
          %v722 = vld [vmem:[%s262] sm:$0x1]
          %v724 = vperm.slane %v722, 0
          %v726 = vadd.f32 %v690, %v724
          %v727 = vadd.f32 %v691, %v724
          %v728 = vadd.f32 %v692, %v724
          %v729 = vadd.f32 %v693, %v724
          %v730 = vadd.f32 %v694, %v724
          %v731 = vadd.f32 %v695, %v724
          %v732 = vadd.f32 %v696, %v724
          %v733 = vadd.f32 %v697, %v724
          %v734 = vadd.f32 %v698, %v724
          %v735 = vadd.f32 %v699, %v724
          %v736 = vadd.f32 %v700, %v724
          %v737 = vadd.f32 %v701, %v724
          %v738 = vadd.f32 %v702, %v724
          %v739 = vadd.f32 %v703, %v724
          %v740 = vadd.f32 %v704, %v724
          %v741 = vadd.f32 %v705, %v724
          %v742 = vadd.f32 %v706, %v724
          %v743 = vadd.f32 %v707, %v724
          %v744 = vadd.f32 %v708, %v724
          %v745 = vadd.f32 %v709, %v724
          %v746 = vadd.f32 %v710, %v724
          %v747 = vadd.f32 %v711, %v724
          %v748 = vadd.f32 %v712, %v724
          %v749 = vadd.f32 %v713, %v724
          %v750 = vadd.f32 %v714, %v724
          %v751 = vadd.f32 %v715, %v724
          %v752 = vadd.f32 %v716, %v724
          %v753 = vadd.f32 %v717, %v724
          %v754 = vadd.f32 %v718, %v724
          %v755 = vadd.f32 %v719, %v724
          %v756 = vadd.f32 %v720, %v724
          %v757 = vadd.f32 %v721, %v724
          %v758 = vxor.u32 %v726, 2147483648
          %v759 = vxor.u32 %v727, 2147483648
          %v760 = vxor.u32 %v728, 2147483648
          %v761 = vxor.u32 %v729, 2147483648
          %v762 = vxor.u32 %v730, 2147483648
          %v763 = vxor.u32 %v731, 2147483648
          %v764 = vxor.u32 %v732, 2147483648
          %v765 = vxor.u32 %v733, 2147483648
          %v766 = vxor.u32 %v734, 2147483648
          %v767 = vxor.u32 %v735, 2147483648
          %v768 = vxor.u32 %v736, 2147483648
          %v769 = vxor.u32 %v737, 2147483648
          %v770 = vxor.u32 %v738, 2147483648
          %v771 = vxor.u32 %v739, 2147483648
          %v772 = vxor.u32 %v740, 2147483648
          %v773 = vxor.u32 %v741, 2147483648
          %v774 = vxor.u32 %v742, 2147483648
          %v775 = vxor.u32 %v743, 2147483648
          %v776 = vxor.u32 %v744, 2147483648
          %v777 = vxor.u32 %v745, 2147483648
          %v778 = vxor.u32 %v746, 2147483648
          %v779 = vxor.u32 %v747, 2147483648
          %v780 = vxor.u32 %v748, 2147483648
          %v781 = vxor.u32 %v749, 2147483648
          %v782 = vxor.u32 %v750, 2147483648
          %v783 = vxor.u32 %v751, 2147483648
          %v784 = vxor.u32 %v752, 2147483648
          %v785 = vxor.u32 %v753, 2147483648
          %v786 = vxor.u32 %v754, 2147483648
          %v787 = vxor.u32 %v755, 2147483648
          %v788 = vxor.u32 %v756, 2147483648
          %v789 = vxor.u32 %v757, 2147483648
          %v790 = vmul.f32 %v758, 1.442695
          %v791 = vpow.pop %v790
          %v792 = vmul.f32 %v759, 1.442695
          %v793 = vpow.pop %v792
          %v794 = vmul.f32 %v760, 1.442695
          %v795 = vpow.pop %v794
          %v796 = vmul.f32 %v761, 1.442695
          %v797 = vpow.pop %v796
          %v798 = vmul.f32 %v762, 1.442695
          %v799 = vpow.pop %v798
          %v800 = vmul.f32 %v763, 1.442695
          %v801 = vpow.pop %v800
          %v802 = vmul.f32 %v764, 1.442695
          %v803 = vpow.pop %v802
          %v804 = vmul.f32 %v765, 1.442695
          %v805 = vpow.pop %v804
          %v806 = vmul.f32 %v766, 1.442695
          %v807 = vpow.pop %v806
          %v808 = vmul.f32 %v767, 1.442695
          %v809 = vpow.pop %v808
          %v810 = vmul.f32 %v768, 1.442695
          %v811 = vpow.pop %v810
          %v812 = vmul.f32 %v769, 1.442695
          %v813 = vpow.pop %v812
          %v814 = vmul.f32 %v770, 1.442695
          %v815 = vpow.pop %v814
          %v816 = vmul.f32 %v771, 1.442695
          %v817 = vpow.pop %v816
          %v818 = vmul.f32 %v772, 1.442695
          %v819 = vpow.pop %v818
          %v820 = vmul.f32 %v773, 1.442695
          %v821 = vpow.pop %v820
          %v822 = vmul.f32 %v774, 1.442695
          %v823 = vpow.pop %v822
          %v824 = vmul.f32 %v775, 1.442695
          %v825 = vpow.pop %v824
          %v826 = vmul.f32 %v776, 1.442695
          %v827 = vpow.pop %v826
          %v828 = vmul.f32 %v777, 1.442695
          %v829 = vpow.pop %v828
          %v830 = vmul.f32 %v778, 1.442695
          %v831 = vpow.pop %v830
          %v832 = vmul.f32 %v779, 1.442695
          %v833 = vpow.pop %v832
          %v834 = vmul.f32 %v780, 1.442695
          %v835 = vpow.pop %v834
          %v836 = vmul.f32 %v781, 1.442695
          %v837 = vpow.pop %v836
          %v838 = vmul.f32 %v782, 1.442695
          %v839 = vpow.pop %v838
          %v840 = vmul.f32 %v783, 1.442695
          %v841 = vpow.pop %v840
          %v842 = vmul.f32 %v784, 1.442695
          %v843 = vpow.pop %v842
          %v844 = vmul.f32 %v785, 1.442695
          %v845 = vpow.pop %v844
          %v846 = vmul.f32 %v786, 1.442695
          %v847 = vpow.pop %v846
          %v848 = vmul.f32 %v787, 1.442695
          %v849 = vpow.pop %v848
          %v850 = vmul.f32 %v788, 1.442695
          %v851 = vpow.pop %v850
          %v852 = vmul.f32 %v789, 1.442695
          %v853 = vpow.pop %v852
          %v854 = vadd.f32 %v791, 1.0
          %v855 = vadd.f32 %v793, 1.0
          %v856 = vadd.f32 %v795, 1.0
          %v857 = vadd.f32 %v797, 1.0
          %v858 = vadd.f32 %v799, 1.0
          %v859 = vadd.f32 %v801, 1.0
          %v860 = vadd.f32 %v803, 1.0
          %v861 = vadd.f32 %v805, 1.0
          %v862 = vadd.f32 %v807, 1.0
          %v863 = vadd.f32 %v809, 1.0
          %v864 = vadd.f32 %v811, 1.0
          %v865 = vadd.f32 %v813, 1.0
          %v866 = vadd.f32 %v815, 1.0
          %v867 = vadd.f32 %v817, 1.0
          %v868 = vadd.f32 %v819, 1.0
          %v869 = vadd.f32 %v821, 1.0
          %v870 = vadd.f32 %v823, 1.0
          %v871 = vadd.f32 %v825, 1.0
          %v872 = vadd.f32 %v827, 1.0
          %v873 = vadd.f32 %v829, 1.0
          %v874 = vadd.f32 %v831, 1.0
          %v875 = vadd.f32 %v833, 1.0
          %v876 = vadd.f32 %v835, 1.0
          %v877 = vadd.f32 %v837, 1.0
          %v878 = vadd.f32 %v839, 1.0
          %v879 = vadd.f32 %v841, 1.0
          %v880 = vadd.f32 %v843, 1.0
          %v881 = vadd.f32 %v845, 1.0
          %v882 = vadd.f32 %v847, 1.0
          %v883 = vadd.f32 %v849, 1.0
          %v884 = vadd.f32 %v851, 1.0
          %v885 = vadd.f32 %v853, 1.0
          %v886 = vrcp.pop %v854
          %v887 = vmul.f32 %v854, %v886
          %v888 = vsub.f32 1.0, %v887
          %v889 = vmul.f32 %v886, %v888
          %v890 = vadd.f32 %v886, %v889
          %vm891 = vweird.f32 %v854
          %vm892 = vweird.f32 %v886
          %vm893 = vmor %vm891, %vm892
          %v894 = vsel %vm893, %v886, %v890
          %v895 = vand.u32 2147483647, %v854
          %vm896 = vcmp.eq.f32.partialorder %v895, 8.507059e+37
          %v897 = vand.u32 %v854, 2147483648
          %v898 = vor.u32 1.1754944e-38, %v897
          %v899 = vsel %vm896, %v898, %v894
          %v900 = vmul.f32 1.0, %v899
          %v901 = vrcp.pop %v855
          %v902 = vmul.f32 %v855, %v901
          %v903 = vsub.f32 1.0, %v902
          %v904 = vmul.f32 %v901, %v903
          %v905 = vadd.f32 %v901, %v904
          %vm906 = vweird.f32 %v855
          %vm907 = vweird.f32 %v901
          %vm908 = vmor %vm906, %vm907
          %v909 = vsel %vm908, %v901, %v905
          %v910 = vand.u32 2147483647, %v855
          %vm911 = vcmp.eq.f32.partialorder %v910, 8.507059e+37
          %v912 = vand.u32 %v855, 2147483648
          %v913 = vor.u32 1.1754944e-38, %v912
          %v914 = vsel %vm911, %v913, %v909
          %v915 = vmul.f32 1.0, %v914
          %v916 = vrcp.pop %v856
          %v917 = vmul.f32 %v856, %v916
          %v918 = vsub.f32 1.0, %v917
          %v919 = vmul.f32 %v916, %v918
          %v920 = vadd.f32 %v916, %v919
          %vm921 = vweird.f32 %v856
          %vm922 = vweird.f32 %v916
          %vm923 = vmor %vm921, %vm922
          %v924 = vsel %vm923, %v916, %v920
          %v925 = vand.u32 2147483647, %v856
          %vm926 = vcmp.eq.f32.partialorder %v925, 8.507059e+37
          %v927 = vand.u32 %v856, 2147483648
          %v928 = vor.u32 1.1754944e-38, %v927
          %v929 = vsel %vm926, %v928, %v924
          %v930 = vmul.f32 1.0, %v929
          %v931 = vrcp.pop %v857
          %v932 = vmul.f32 %v857, %v931
          %v933 = vsub.f32 1.0, %v932
          %v934 = vmul.f32 %v931, %v933
          %v935 = vadd.f32 %v931, %v934
          %vm936 = vweird.f32 %v857
          %vm937 = vweird.f32 %v931
          %vm938 = vmor %vm936, %vm937
          %v939 = vsel %vm938, %v931, %v935
          %v940 = vand.u32 2147483647, %v857
          %vm941 = vcmp.eq.f32.partialorder %v940, 8.507059e+37
          %v942 = vand.u32 %v857, 2147483648
          %v943 = vor.u32 1.1754944e-38, %v942
          %v944 = vsel %vm941, %v943, %v939
          %v945 = vmul.f32 1.0, %v944
          %v946 = vrcp.pop %v858
          %v947 = vmul.f32 %v858, %v946
          %v948 = vsub.f32 1.0, %v947
          %v949 = vmul.f32 %v946, %v948
          %v950 = vadd.f32 %v946, %v949
          %vm951 = vweird.f32 %v858
          %vm952 = vweird.f32 %v946
          %vm953 = vmor %vm951, %vm952
          %v954 = vsel %vm953, %v946, %v950
          %v955 = vand.u32 2147483647, %v858
          %vm956 = vcmp.eq.f32.partialorder %v955, 8.507059e+37
          %v957 = vand.u32 %v858, 2147483648
          %v958 = vor.u32 1.1754944e-38, %v957
          %v959 = vsel %vm956, %v958, %v954
          %v960 = vmul.f32 1.0, %v959
          %v961 = vrcp.pop %v859
          %v962 = vmul.f32 %v859, %v961
          %v963 = vsub.f32 1.0, %v962
          %v964 = vmul.f32 %v961, %v963
          %v965 = vadd.f32 %v961, %v964
          %vm966 = vweird.f32 %v859
          %vm967 = vweird.f32 %v961
          %vm968 = vmor %vm966, %vm967
          %v969 = vsel %vm968, %v961, %v965
          %v970 = vand.u32 2147483647, %v859
          %vm971 = vcmp.eq.f32.partialorder %v970, 8.507059e+37
          %v972 = vand.u32 %v859, 2147483648
          %v973 = vor.u32 1.1754944e-38, %v972
          %v974 = vsel %vm971, %v973, %v969
          %v975 = vmul.f32 1.0, %v974
          %v976 = vrcp.pop %v860
          %v977 = vmul.f32 %v860, %v976
          %v978 = vsub.f32 1.0, %v977
          %v979 = vmul.f32 %v976, %v978
          %v980 = vadd.f32 %v976, %v979
          %vm981 = vweird.f32 %v860
          %vm982 = vweird.f32 %v976
          %vm983 = vmor %vm981, %vm982
          %v984 = vsel %vm983, %v976, %v980
          %v985 = vand.u32 2147483647, %v860
          %vm986 = vcmp.eq.f32.partialorder %v985, 8.507059e+37
          %v987 = vand.u32 %v860, 2147483648
          %v988 = vor.u32 1.1754944e-38, %v987
          %v989 = vsel %vm986, %v988, %v984
          %v990 = vmul.f32 1.0, %v989
          %v991 = vrcp.pop %v861
          %v992 = vmul.f32 %v861, %v991
          %v993 = vsub.f32 1.0, %v992
          %v994 = vmul.f32 %v991, %v993
          %v995 = vadd.f32 %v991, %v994
          %vm996 = vweird.f32 %v861
          %vm997 = vweird.f32 %v991
          %vm998 = vmor %vm996, %vm997
          %v999 = vsel %vm998, %v991, %v995
          %v1000 = vand.u32 2147483647, %v861
          %vm1001 = vcmp.eq.f32.partialorder %v1000, 8.507059e+37
          %v1002 = vand.u32 %v861, 2147483648
          %v1003 = vor.u32 1.1754944e-38, %v1002
          %v1004 = vsel %vm1001, %v1003, %v999
          %v1005 = vmul.f32 1.0, %v1004
          %v1006 = vrcp.pop %v862
          %v1007 = vmul.f32 %v862, %v1006
          %v1008 = vsub.f32 1.0, %v1007
          %v1009 = vmul.f32 %v1006, %v1008
          %v1010 = vadd.f32 %v1006, %v1009
          %vm1011 = vweird.f32 %v862
          %vm1012 = vweird.f32 %v1006
          %vm1013 = vmor %vm1011, %vm1012
          %v1014 = vsel %vm1013, %v1006, %v1010
          %v1015 = vand.u32 2147483647, %v862
          %vm1016 = vcmp.eq.f32.partialorder %v1015, 8.507059e+37
          %v1017 = vand.u32 %v862, 2147483648
          %v1018 = vor.u32 1.1754944e-38, %v1017
          %v1019 = vsel %vm1016, %v1018, %v1014
          %v1020 = vmul.f32 1.0, %v1019
          %v1021 = vrcp.pop %v863
          %v1022 = vmul.f32 %v863, %v1021
          %v1023 = vsub.f32 1.0, %v1022
          %v1024 = vmul.f32 %v1021, %v1023
          %v1025 = vadd.f32 %v1021, %v1024
          %vm1026 = vweird.f32 %v863
          %vm1027 = vweird.f32 %v1021
          %vm1028 = vmor %vm1026, %vm1027
          %v1029 = vsel %vm1028, %v1021, %v1025
          %v1030 = vand.u32 2147483647, %v863
          %vm1031 = vcmp.eq.f32.partialorder %v1030, 8.507059e+37
          %v1032 = vand.u32 %v863, 2147483648
          %v1033 = vor.u32 1.1754944e-38, %v1032
          %v1034 = vsel %vm1031, %v1033, %v1029
          %v1035 = vmul.f32 1.0, %v1034
          %v1036 = vrcp.pop %v864
          %v1037 = vmul.f32 %v864, %v1036
          %v1038 = vsub.f32 1.0, %v1037
          %v1039 = vmul.f32 %v1036, %v1038
          %v1040 = vadd.f32 %v1036, %v1039
          %vm1041 = vweird.f32 %v864
          %vm1042 = vweird.f32 %v1036
          %vm1043 = vmor %vm1041, %vm1042
          %v1044 = vsel %vm1043, %v1036, %v1040
          %v1045 = vand.u32 2147483647, %v864
          %vm1046 = vcmp.eq.f32.partialorder %v1045, 8.507059e+37
          %v1047 = vand.u32 %v864, 2147483648
          %v1048 = vor.u32 1.1754944e-38, %v1047
          %v1049 = vsel %vm1046, %v1048, %v1044
          %v1050 = vmul.f32 1.0, %v1049
          %v1051 = vrcp.pop %v865
          %v1052 = vmul.f32 %v865, %v1051
          %v1053 = vsub.f32 1.0, %v1052
          %v1054 = vmul.f32 %v1051, %v1053
          %v1055 = vadd.f32 %v1051, %v1054
          %vm1056 = vweird.f32 %v865
          %vm1057 = vweird.f32 %v1051
          %vm1058 = vmor %vm1056, %vm1057
          %v1059 = vsel %vm1058, %v1051, %v1055
          %v1060 = vand.u32 2147483647, %v865
          %vm1061 = vcmp.eq.f32.partialorder %v1060, 8.507059e+37
          %v1062 = vand.u32 %v865, 2147483648
          %v1063 = vor.u32 1.1754944e-38, %v1062
          %v1064 = vsel %vm1061, %v1063, %v1059
          %v1065 = vmul.f32 1.0, %v1064
          %v1066 = vrcp.pop %v866
          %v1067 = vmul.f32 %v866, %v1066
          %v1068 = vsub.f32 1.0, %v1067
          %v1069 = vmul.f32 %v1066, %v1068
          %v1070 = vadd.f32 %v1066, %v1069
          %vm1071 = vweird.f32 %v866
          %vm1072 = vweird.f32 %v1066
          %vm1073 = vmor %vm1071, %vm1072
          %v1074 = vsel %vm1073, %v1066, %v1070
          %v1075 = vand.u32 2147483647, %v866
          %vm1076 = vcmp.eq.f32.partialorder %v1075, 8.507059e+37
          %v1077 = vand.u32 %v866, 2147483648
          %v1078 = vor.u32 1.1754944e-38, %v1077
          %v1079 = vsel %vm1076, %v1078, %v1074
          %v1080 = vmul.f32 1.0, %v1079
          %v1081 = vrcp.pop %v867
          %v1082 = vmul.f32 %v867, %v1081
          %v1083 = vsub.f32 1.0, %v1082
          %v1084 = vmul.f32 %v1081, %v1083
          %v1085 = vadd.f32 %v1081, %v1084
          %vm1086 = vweird.f32 %v867
          %vm1087 = vweird.f32 %v1081
          %vm1088 = vmor %vm1086, %vm1087
          %v1089 = vsel %vm1088, %v1081, %v1085
          %v1090 = vand.u32 2147483647, %v867
          %vm1091 = vcmp.eq.f32.partialorder %v1090, 8.507059e+37
          %v1092 = vand.u32 %v867, 2147483648
          %v1093 = vor.u32 1.1754944e-38, %v1092
          %v1094 = vsel %vm1091, %v1093, %v1089
          %v1095 = vmul.f32 1.0, %v1094
          %v1096 = vrcp.pop %v868
          %v1097 = vmul.f32 %v868, %v1096
          %v1098 = vsub.f32 1.0, %v1097
          %v1099 = vmul.f32 %v1096, %v1098
          %v1100 = vadd.f32 %v1096, %v1099
          %vm1101 = vweird.f32 %v868
          %vm1102 = vweird.f32 %v1096
          %vm1103 = vmor %vm1101, %vm1102
          %v1104 = vsel %vm1103, %v1096, %v1100
          %v1105 = vand.u32 2147483647, %v868
          %vm1106 = vcmp.eq.f32.partialorder %v1105, 8.507059e+37
          %v1107 = vand.u32 %v868, 2147483648
          %v1108 = vor.u32 1.1754944e-38, %v1107
          %v1109 = vsel %vm1106, %v1108, %v1104
          %v1110 = vmul.f32 1.0, %v1109
          %v1111 = vrcp.pop %v869
          %v1112 = vmul.f32 %v869, %v1111
          %v1113 = vsub.f32 1.0, %v1112
          %v1114 = vmul.f32 %v1111, %v1113
          %v1115 = vadd.f32 %v1111, %v1114
          %vm1116 = vweird.f32 %v869
          %vm1117 = vweird.f32 %v1111
          %vm1118 = vmor %vm1116, %vm1117
          %v1119 = vsel %vm1118, %v1111, %v1115
          %v1120 = vand.u32 2147483647, %v869
          %vm1121 = vcmp.eq.f32.partialorder %v1120, 8.507059e+37
          %v1122 = vand.u32 %v869, 2147483648
          %v1123 = vor.u32 1.1754944e-38, %v1122
          %v1124 = vsel %vm1121, %v1123, %v1119
          %v1125 = vmul.f32 1.0, %v1124
          %v1126 = vrcp.pop %v870
          %v1127 = vmul.f32 %v870, %v1126
          %v1128 = vsub.f32 1.0, %v1127
          %v1129 = vmul.f32 %v1126, %v1128
          %v1130 = vadd.f32 %v1126, %v1129
          %vm1131 = vweird.f32 %v870
          %vm1132 = vweird.f32 %v1126
          %vm1133 = vmor %vm1131, %vm1132
          %v1134 = vsel %vm1133, %v1126, %v1130
          %v1135 = vand.u32 2147483647, %v870
          %vm1136 = vcmp.eq.f32.partialorder %v1135, 8.507059e+37
          %v1137 = vand.u32 %v870, 2147483648
          %v1138 = vor.u32 1.1754944e-38, %v1137
          %v1139 = vsel %vm1136, %v1138, %v1134
          %v1140 = vmul.f32 1.0, %v1139
          %v1141 = vrcp.pop %v871
          %v1142 = vmul.f32 %v871, %v1141
          %v1143 = vsub.f32 1.0, %v1142
          %v1144 = vmul.f32 %v1141, %v1143
          %v1145 = vadd.f32 %v1141, %v1144
          %vm1146 = vweird.f32 %v871
          %vm1147 = vweird.f32 %v1141
          %vm1148 = vmor %vm1146, %vm1147
          %v1149 = vsel %vm1148, %v1141, %v1145
          %v1150 = vand.u32 2147483647, %v871
          %vm1151 = vcmp.eq.f32.partialorder %v1150, 8.507059e+37
          %v1152 = vand.u32 %v871, 2147483648
          %v1153 = vor.u32 1.1754944e-38, %v1152
          %v1154 = vsel %vm1151, %v1153, %v1149
          %v1155 = vmul.f32 1.0, %v1154
          %v1156 = vrcp.pop %v872
          %v1157 = vmul.f32 %v872, %v1156
          %v1158 = vsub.f32 1.0, %v1157
          %v1159 = vmul.f32 %v1156, %v1158
          %v1160 = vadd.f32 %v1156, %v1159
          %vm1161 = vweird.f32 %v872
          %vm1162 = vweird.f32 %v1156
          %vm1163 = vmor %vm1161, %vm1162
          %v1164 = vsel %vm1163, %v1156, %v1160
          %v1165 = vand.u32 2147483647, %v872
          %vm1166 = vcmp.eq.f32.partialorder %v1165, 8.507059e+37
          %v1167 = vand.u32 %v872, 2147483648
          %v1168 = vor.u32 1.1754944e-38, %v1167
          %v1169 = vsel %vm1166, %v1168, %v1164
          %v1170 = vmul.f32 1.0, %v1169
          %v1171 = vrcp.pop %v873
          %v1172 = vmul.f32 %v873, %v1171
          %v1173 = vsub.f32 1.0, %v1172
          %v1174 = vmul.f32 %v1171, %v1173
          %v1175 = vadd.f32 %v1171, %v1174
          %vm1176 = vweird.f32 %v873
          %vm1177 = vweird.f32 %v1171
          %vm1178 = vmor %vm1176, %vm1177
          %v1179 = vsel %vm1178, %v1171, %v1175
          %v1180 = vand.u32 2147483647, %v873
          %vm1181 = vcmp.eq.f32.partialorder %v1180, 8.507059e+37
          %v1182 = vand.u32 %v873, 2147483648
          %v1183 = vor.u32 1.1754944e-38, %v1182
          %v1184 = vsel %vm1181, %v1183, %v1179
          %v1185 = vmul.f32 1.0, %v1184
          %v1186 = vrcp.pop %v874
          %v1187 = vmul.f32 %v874, %v1186
          %v1188 = vsub.f32 1.0, %v1187
          %v1189 = vmul.f32 %v1186, %v1188
          %v1190 = vadd.f32 %v1186, %v1189
          %vm1191 = vweird.f32 %v874
          %vm1192 = vweird.f32 %v1186
          %vm1193 = vmor %vm1191, %vm1192
          %v1194 = vsel %vm1193, %v1186, %v1190
          %v1195 = vand.u32 2147483647, %v874
          %vm1196 = vcmp.eq.f32.partialorder %v1195, 8.507059e+37
          %v1197 = vand.u32 %v874, 2147483648
          %v1198 = vor.u32 1.1754944e-38, %v1197
          %v1199 = vsel %vm1196, %v1198, %v1194
          %v1200 = vmul.f32 1.0, %v1199
          %v1201 = vrcp.pop %v875
          %v1202 = vmul.f32 %v875, %v1201
          %v1203 = vsub.f32 1.0, %v1202
          %v1204 = vmul.f32 %v1201, %v1203
          %v1205 = vadd.f32 %v1201, %v1204
          %vm1206 = vweird.f32 %v875
          %vm1207 = vweird.f32 %v1201
          %vm1208 = vmor %vm1206, %vm1207
          %v1209 = vsel %vm1208, %v1201, %v1205
          %v1210 = vand.u32 2147483647, %v875
          %vm1211 = vcmp.eq.f32.partialorder %v1210, 8.507059e+37
          %v1212 = vand.u32 %v875, 2147483648
          %v1213 = vor.u32 1.1754944e-38, %v1212
          %v1214 = vsel %vm1211, %v1213, %v1209
          %v1215 = vmul.f32 1.0, %v1214
          %v1216 = vrcp.pop %v876
          %v1217 = vmul.f32 %v876, %v1216
          %v1218 = vsub.f32 1.0, %v1217
          %v1219 = vmul.f32 %v1216, %v1218
          %v1220 = vadd.f32 %v1216, %v1219
          %vm1221 = vweird.f32 %v876
          %vm1222 = vweird.f32 %v1216
          %vm1223 = vmor %vm1221, %vm1222
          %v1224 = vsel %vm1223, %v1216, %v1220
          %v1225 = vand.u32 2147483647, %v876
          %vm1226 = vcmp.eq.f32.partialorder %v1225, 8.507059e+37
          %v1227 = vand.u32 %v876, 2147483648
          %v1228 = vor.u32 1.1754944e-38, %v1227
          %v1229 = vsel %vm1226, %v1228, %v1224
          %v1230 = vmul.f32 1.0, %v1229
          %v1231 = vrcp.pop %v877
          %v1232 = vmul.f32 %v877, %v1231
          %v1233 = vsub.f32 1.0, %v1232
          %v1234 = vmul.f32 %v1231, %v1233
          %v1235 = vadd.f32 %v1231, %v1234
          %vm1236 = vweird.f32 %v877
          %vm1237 = vweird.f32 %v1231
          %vm1238 = vmor %vm1236, %vm1237
          %v1239 = vsel %vm1238, %v1231, %v1235
          %v1240 = vand.u32 2147483647, %v877
          %vm1241 = vcmp.eq.f32.partialorder %v1240, 8.507059e+37
          %v1242 = vand.u32 %v877, 2147483648
          %v1243 = vor.u32 1.1754944e-38, %v1242
          %v1244 = vsel %vm1241, %v1243, %v1239
          %v1245 = vmul.f32 1.0, %v1244
          %v1246 = vrcp.pop %v878
          %v1247 = vmul.f32 %v878, %v1246
          %v1248 = vsub.f32 1.0, %v1247
          %v1249 = vmul.f32 %v1246, %v1248
          %v1250 = vadd.f32 %v1246, %v1249
          %vm1251 = vweird.f32 %v878
          %vm1252 = vweird.f32 %v1246
          %vm1253 = vmor %vm1251, %vm1252
          %v1254 = vsel %vm1253, %v1246, %v1250
          %v1255 = vand.u32 2147483647, %v878
          %vm1256 = vcmp.eq.f32.partialorder %v1255, 8.507059e+37
          %v1257 = vand.u32 %v878, 2147483648
          %v1258 = vor.u32 1.1754944e-38, %v1257
          %v1259 = vsel %vm1256, %v1258, %v1254
          %v1260 = vmul.f32 1.0, %v1259
          %v1261 = vrcp.pop %v879
          %v1262 = vmul.f32 %v879, %v1261
          %v1263 = vsub.f32 1.0, %v1262
          %v1264 = vmul.f32 %v1261, %v1263
          %v1265 = vadd.f32 %v1261, %v1264
          %vm1266 = vweird.f32 %v879
          %vm1267 = vweird.f32 %v1261
          %vm1268 = vmor %vm1266, %vm1267
          %v1269 = vsel %vm1268, %v1261, %v1265
          %v1270 = vand.u32 2147483647, %v879
          %vm1271 = vcmp.eq.f32.partialorder %v1270, 8.507059e+37
          %v1272 = vand.u32 %v879, 2147483648
          %v1273 = vor.u32 1.1754944e-38, %v1272
          %v1274 = vsel %vm1271, %v1273, %v1269
          %v1275 = vmul.f32 1.0, %v1274
          %v1276 = vrcp.pop %v880
          %v1277 = vmul.f32 %v880, %v1276
          %v1278 = vsub.f32 1.0, %v1277
          %v1279 = vmul.f32 %v1276, %v1278
          %v1280 = vadd.f32 %v1276, %v1279
          %vm1281 = vweird.f32 %v880
          %vm1282 = vweird.f32 %v1276
          %vm1283 = vmor %vm1281, %vm1282
          %v1284 = vsel %vm1283, %v1276, %v1280
          %v1285 = vand.u32 2147483647, %v880
          %vm1286 = vcmp.eq.f32.partialorder %v1285, 8.507059e+37
          %v1287 = vand.u32 %v880, 2147483648
          %v1288 = vor.u32 1.1754944e-38, %v1287
          %v1289 = vsel %vm1286, %v1288, %v1284
          %v1290 = vmul.f32 1.0, %v1289
          %v1291 = vrcp.pop %v881
          %v1292 = vmul.f32 %v881, %v1291
          %v1293 = vsub.f32 1.0, %v1292
          %v1294 = vmul.f32 %v1291, %v1293
          %v1295 = vadd.f32 %v1291, %v1294
          %vm1296 = vweird.f32 %v881
          %vm1297 = vweird.f32 %v1291
          %vm1298 = vmor %vm1296, %vm1297
          %v1299 = vsel %vm1298, %v1291, %v1295
          %v1300 = vand.u32 2147483647, %v881
          %vm1301 = vcmp.eq.f32.partialorder %v1300, 8.507059e+37
          %v1302 = vand.u32 %v881, 2147483648
          %v1303 = vor.u32 1.1754944e-38, %v1302
          %v1304 = vsel %vm1301, %v1303, %v1299
          %v1305 = vmul.f32 1.0, %v1304
          %v1306 = vrcp.pop %v882
          %v1307 = vmul.f32 %v882, %v1306
          %v1308 = vsub.f32 1.0, %v1307
          %v1309 = vmul.f32 %v1306, %v1308
          %v1310 = vadd.f32 %v1306, %v1309
          %vm1311 = vweird.f32 %v882
          %vm1312 = vweird.f32 %v1306
          %vm1313 = vmor %vm1311, %vm1312
          %v1314 = vsel %vm1313, %v1306, %v1310
          %v1315 = vand.u32 2147483647, %v882
          %vm1316 = vcmp.eq.f32.partialorder %v1315, 8.507059e+37
          %v1317 = vand.u32 %v882, 2147483648
          %v1318 = vor.u32 1.1754944e-38, %v1317
          %v1319 = vsel %vm1316, %v1318, %v1314
          %v1320 = vmul.f32 1.0, %v1319
          %v1321 = vrcp.pop %v883
          %v1322 = vmul.f32 %v883, %v1321
          %v1323 = vsub.f32 1.0, %v1322
          %v1324 = vmul.f32 %v1321, %v1323
          %v1325 = vadd.f32 %v1321, %v1324
          %vm1326 = vweird.f32 %v883
          %vm1327 = vweird.f32 %v1321
          %vm1328 = vmor %vm1326, %vm1327
          %v1329 = vsel %vm1328, %v1321, %v1325
          %v1330 = vand.u32 2147483647, %v883
          %vm1331 = vcmp.eq.f32.partialorder %v1330, 8.507059e+37
          %v1332 = vand.u32 %v883, 2147483648
          %v1333 = vor.u32 1.1754944e-38, %v1332
          %v1334 = vsel %vm1331, %v1333, %v1329
          %v1335 = vmul.f32 1.0, %v1334
          %v1336 = vrcp.pop %v884
          %v1337 = vmul.f32 %v884, %v1336
          %v1338 = vsub.f32 1.0, %v1337
          %v1339 = vmul.f32 %v1336, %v1338
          %v1340 = vadd.f32 %v1336, %v1339
          %vm1341 = vweird.f32 %v884
          %vm1342 = vweird.f32 %v1336
          %vm1343 = vmor %vm1341, %vm1342
          %v1344 = vsel %vm1343, %v1336, %v1340
          %v1345 = vand.u32 2147483647, %v884
          %vm1346 = vcmp.eq.f32.partialorder %v1345, 8.507059e+37
          %v1347 = vand.u32 %v884, 2147483648
          %v1348 = vor.u32 1.1754944e-38, %v1347
          %v1349 = vsel %vm1346, %v1348, %v1344
          %v1350 = vmul.f32 1.0, %v1349
          %v1351 = vrcp.pop %v885
          %v1352 = vmul.f32 %v885, %v1351
          %v1353 = vsub.f32 1.0, %v1352
          %v1354 = vmul.f32 %v1351, %v1353
          %v1355 = vadd.f32 %v1351, %v1354
          %vm1356 = vweird.f32 %v885
          %vm1357 = vweird.f32 %v1351
          %vm1358 = vmor %vm1356, %vm1357
          %v1359 = vsel %vm1358, %v1351, %v1355
          %v1360 = vand.u32 2147483647, %v885
          %vm1361 = vcmp.eq.f32.partialorder %v1360, 8.507059e+37
          %v1362 = vand.u32 %v885, 2147483648
          %v1363 = vor.u32 1.1754944e-38, %v1362
          %v1364 = vsel %vm1361, %v1363, %v1359
          %v1365 = vmul.f32 1.0, %v1364
          %v1366 = vmul.f32 %v726, %v900
          %v1367 = vmul.f32 %v727, %v915
          %v1368 = vmul.f32 %v728, %v930
          %v1369 = vmul.f32 %v729, %v945
          %v1370 = vmul.f32 %v730, %v960
          %v1371 = vmul.f32 %v731, %v975
          %v1372 = vmul.f32 %v732, %v990
          %v1373 = vmul.f32 %v733, %v1005
          %v1374 = vmul.f32 %v734, %v1020
          %v1375 = vmul.f32 %v735, %v1035
          %v1376 = vmul.f32 %v736, %v1050
          %v1377 = vmul.f32 %v737, %v1065
          %v1378 = vmul.f32 %v738, %v1080
          %v1379 = vmul.f32 %v739, %v1095
          %v1380 = vmul.f32 %v740, %v1110
          %v1381 = vmul.f32 %v741, %v1125
          %v1382 = vmul.f32 %v742, %v1140
          %v1383 = vmul.f32 %v743, %v1155
          %v1384 = vmul.f32 %v744, %v1170
          %v1385 = vmul.f32 %v745, %v1185
          %v1386 = vmul.f32 %v746, %v1200
          %v1387 = vmul.f32 %v747, %v1215
          %v1388 = vmul.f32 %v748, %v1230
          %v1389 = vmul.f32 %v749, %v1245
          %v1390 = vmul.f32 %v750, %v1260
          %v1391 = vmul.f32 %v751, %v1275
          %v1392 = vmul.f32 %v752, %v1290
          %v1393 = vmul.f32 %v753, %v1305
          %v1394 = vmul.f32 %v754, %v1320
          %v1395 = vmul.f32 %v755, %v1335
          %v1396 = vmul.f32 %v756, %v1350
          %v1397 = vmul.f32 %v757, %v1365
          %v1398 = vpack.c.bf16 %v1366, %v1366
          %v1399 = vpack.c.bf16 %v1367, %v1367
          %v1400 = vpack.c.bf16 %v1368, %v1368
          %v1401 = vpack.c.bf16 %v1369, %v1369
          %v1402 = vpack.c.bf16 %v1370, %v1370
          %v1403 = vpack.c.bf16 %v1371, %v1371
          %v1404 = vpack.c.bf16 %v1372, %v1372
          %v1405 = vpack.c.bf16 %v1373, %v1373
          %v1406 = vpack.c.bf16 %v1374, %v1374
          %v1407 = vpack.c.bf16 %v1375, %v1375
          %v1408 = vpack.c.bf16 %v1376, %v1376
          %v1409 = vpack.c.bf16 %v1377, %v1377
          %v1410 = vpack.c.bf16 %v1378, %v1378
          %v1411 = vpack.c.bf16 %v1379, %v1379
          %v1412 = vpack.c.bf16 %v1380, %v1380
          %v1413 = vpack.c.bf16 %v1381, %v1381
          %v1414 = vpack.c.bf16 %v1382, %v1382
          %v1415 = vpack.c.bf16 %v1383, %v1383
          %v1416 = vpack.c.bf16 %v1384, %v1384
          %v1417 = vpack.c.bf16 %v1385, %v1385
          %v1418 = vpack.c.bf16 %v1386, %v1386
          %v1419 = vpack.c.bf16 %v1387, %v1387
          %v1420 = vpack.c.bf16 %v1388, %v1388
          %v1421 = vpack.c.bf16 %v1389, %v1389
          %v1422 = vpack.c.bf16 %v1390, %v1390
          %v1423 = vpack.c.bf16 %v1391, %v1391
          %v1424 = vpack.c.bf16 %v1392, %v1392
          %v1425 = vpack.c.bf16 %v1393, %v1393
          %v1426 = vpack.c.bf16 %v1394, %v1394
          %v1427 = vpack.c.bf16 %v1395, %v1395
          %v1428 = vpack.c.bf16 %v1396, %v1396
          %v1429 = vpack.c.bf16 %v1397, %v1397
          %vm1430 = vcmask 519168
          %1431 = vst.msk [vmem:[%s270] sm:$0xf] %vm1430, %v1398
          %1432 = vst.msk [vmem:[%s270 + $0x4] sm:$0xf] %vm1430, %v1399
          %1433 = vst.msk [vmem:[%s270 + $0x8] sm:$0xf] %vm1430, %v1400
          %1434 = vst.msk [vmem:[%s270 + $0xc] sm:$0xf] %vm1430, %v1401
          %1435 = vst.msk [vmem:[%s270 + $0x10] sm:$0xf] %vm1430, %v1402
          %1436 = vst.msk [vmem:[%s270 + $0x14] sm:$0xf] %vm1430, %v1403
          %1437 = vst.msk [vmem:[%s270 + $0x18] sm:$0xf] %vm1430, %v1404
          %1438 = vst.msk [vmem:[%s270 + $0x1c] sm:$0xf] %vm1430, %v1405
          %1439 = vst.msk [vmem:[%s270 + $0x20] sm:$0xf] %vm1430, %v1406
          %1440 = vst.msk [vmem:[%s270 + $0x24] sm:$0xf] %vm1430, %v1407
          %1441 = vst.msk [vmem:[%s270 + $0x28] sm:$0xf] %vm1430, %v1408
          %1442 = vst.msk [vmem:[%s270 + $0x2c] sm:$0xf] %vm1430, %v1409
          %1443 = vst.msk [vmem:[%s270 + $0x30] sm:$0xf] %vm1430, %v1410
          %1444 = vst.msk [vmem:[%s270 + $0x34] sm:$0xf] %vm1430, %v1411
          %1445 = vst.msk [vmem:[%s270 + $0x38] sm:$0xf] %vm1430, %v1412
          %1446 = vst.msk [vmem:[%s270 + $0x3c] sm:$0xf] %vm1430, %v1413
          %1447 = vst.msk [vmem:[%s270 + $0x40] sm:$0xf] %vm1430, %v1414
          %1448 = vst.msk [vmem:[%s270 + $0x44] sm:$0xf] %vm1430, %v1415
          %1449 = vst.msk [vmem:[%s270 + $0x48] sm:$0xf] %vm1430, %v1416
          %1450 = vst.msk [vmem:[%s270 + $0x4c] sm:$0xf] %vm1430, %v1417
          %1451 = vst.msk [vmem:[%s270 + $0x50] sm:$0xf] %vm1430, %v1418
          %1452 = vst.msk [vmem:[%s270 + $0x54] sm:$0xf] %vm1430, %v1419
          %1453 = vst.msk [vmem:[%s270 + $0x58] sm:$0xf] %vm1430, %v1420
          %1454 = vst.msk [vmem:[%s270 + $0x5c] sm:$0xf] %vm1430, %v1421
          %1455 = vst.msk [vmem:[%s270 + $0x60] sm:$0xf] %vm1430, %v1422
          %1456 = vst.msk [vmem:[%s270 + $0x64] sm:$0xf] %vm1430, %v1423
          %1457 = vst.msk [vmem:[%s270 + $0x68] sm:$0xf] %vm1430, %v1424
          %1458 = vst.msk [vmem:[%s270 + $0x6c] sm:$0xf] %vm1430, %v1425
          %1459 = vst.msk [vmem:[%s270 + $0x70] sm:$0xf] %vm1430, %v1426
          %1460 = vst.msk [vmem:[%s270 + $0x74] sm:$0xf] %vm1430, %v1427
          %1461 = vst.msk [vmem:[%s270 + $0x78] sm:$0xf] %vm1430, %v1428
          %1462 = vst.msk [vmem:[%s270 + $0x7c] sm:$0xf] %vm1430, %v1429
        $region44: #{tpu_custom_call.1} parent=31 // pred_fallthru
          _
        %s1463 = smul.u32 32, %s22
        %p1464 = scmp.lt.s32.totalorder %s1463, 127
        %s1465 = scalar_select %p1464, %s1463, 127
        %p1466 = scmp.lt.s32.totalorder %s23, 0
        %s1467 = scalar_select %p1466, %s23, 0
        %s1468 = sadd.s32 %s1467, %s1465
        %s1469 = smul.addr %s1468, 4
        %s1470 = scalar_lea.vmem %s3, %s1469
        // Predicated region
        $region45: #{tpu_custom_call.1} parent=31 // pred_check
          %p1471 = pneg %p138
        $region46: #{tpu_custom_call.1} parent=31 // pred_check_branch
          %1473 = sbr.rel (%p1471) target = $region48
        $region47: #{tpu_custom_call.1} parent=31 // pred_region
          %s1474 = smul.u32 32, %s22
        $region48: #{tpu_custom_call.1} parent=31 // pred_fallthru
          _
      $region32: #{tpu_custom_call.1} parent=5 // pred_fallthru
        _
      %p1475 = scmp.le.s32.totalorder 2, %s12
      // Predicated region
      $region49: #{tpu_custom_call.1} parent=5 // pred_check
        %p1476 = pneg %p1475
      $region50: #{tpu_custom_call.1} parent=5 // pred_check_branch
        %1478 = sbr.rel (%p1476) target = $region52
      $region51: #{tpu_custom_call.1} parent=5 // pred_region
        %s1479 = ssub.s32 %s12, 2
        // Predicated region
        $region53: #{tpu_custom_call.1} parent=51 // pred_check
          %p1480 = pneg %p144
        $region54: #{tpu_custom_call.1} parent=51 // pred_check_branch
          %1482 = sbr.rel (%p1480) target = $region56
        $region55: #{tpu_custom_call.1} parent=51 // pred_region
          %s1483 = smul.u32 32, %s25
          %p1484 = scmp.lt.s32.totalorder %s1483, 127
          %s1485 = scalar_select %p1484, %s1483, 127
          %p1486 = scmp.lt.s32.totalorder %s26, 0
          %s1487 = scalar_select %p1486, %s26, 0
          %s1488 = sadd.s32 %s1487, %s1485
          %s1489 = smul.addr %s1488, 4
          %s1490 = scalar_lea.vmem %s3, %s1489
        $region56: #{tpu_custom_call.1} parent=51 // pred_fallthru
          _
      $region52: #{tpu_custom_call.1} parent=5 // pred_fallthru
        _
    $region6: #{tpu_custom_call.1} parent=1 // loop_footer
      %s16 = sadd.s32 1, %s12
    $region7: #{tpu_custom_call.1} parent=1 // loop_footer_branch
      %11 = sbr.rel target = $region3
    $region8: #{tpu_custom_call.1} parent=1 // loop_exit
      _
    %1491 = vsyncpa [#allocation4], 1
    %s1492 = scalar_lea.sflag [#allocation4], 1
    %1493 = vsyncpa %s1492, 1

</llo_original>
